<compile_context>
chip_gen: v7x
topology: tpu7x:2x2x1
jax: 0.10.0
libtpu: 0.0.40
codegen_flags: <defaults>
</compile_context>

<pallas_src>
import functools

import jax
import jax.numpy as jnp
from jax import lax
from jax.experimental import pallas as pl
from jax.experimental.pallas import tpu as pltpu


def _edge_conv_kernel(feat_ref, knn_ref, w_ref, shift_ref, out_ref,
                      *, num_points, k, tile_n, cout, bt):
    """One (batch-block, point-tile) per grid step.

    feat_ref  : (BT, Cin, N)        full point dim (gather source spans all N)
    knn_ref   : (1, BT, (K+1)*TN)   int32, column q = kk*TN + n; kk==K is the
                                    self index of the tile's own points
    w_ref     : (2*Cout, Cin)       [BN-folded conv1 ; BN-folded conv2]
    shift_ref : (Cout, 1)           BN shift = beta - scale * running_mean
    out_ref   : (BT, Cout, TN)      float32
    """
    qt = (k + 1) * tile_n
    w = w_ref[...]                                        # (2*Cout, Cin)
    shift = shift_ref[...]                                # (Cout, 1)
    knn_tile = knn_ref[0]                                 # (BT, (K+1)*TN) int32
    # Hoisted out of the batch loop (JAX does not CSE broadcast_in_dim).
    rows = lax.broadcasted_iota(jnp.int32, (num_points, qt), 0)
    inv_k = 1.0 / k

    for b in range(bt):                                   # BT is small: static
        feat = feat_ref[b]                                # (Cin, N)

        # Fused conv1 + conv2 (one MXU pass, fp32 accumulation).
        # rows [0,Cout) -> local' = scale*conv1, rows [Cout,2Cout) -> edge'.
        both = jnp.dot(w, feat, preferred_element_type=jnp.float32)  # (2Cout, N)

        # One-hot selection for ALL K neighbours + the central point at once:
        # sel[m, kk*TN + n] = (m == index of selection kk for output point n).
        sel = (rows == knn_tile[b:b + 1, :]).astype(jnp.float32)     # (N, (K+1)*TN)

        # Single wide gather matmul (dominant FLOP term, one MXU stream).
        res = jnp.dot(both, sel, preferred_element_type=jnp.float32)  # (2Cout,(K+1)*TN)

        # Central feature: local' rows, self-index column block (static slices
        # at sublane/lane-aligned offsets -> pure vreg selection, no relayout).
        central = res[:cout, k * tile_n:]                 # (Cout, TN)
        base = shift - central                            # BN shift - central

        acc = jnp.zeros((cout, tile_n), jnp.float32)
        for kk in range(k):                               # cheap VPU adds only
            neigh = res[cout:, kk * tile_n:(kk + 1) * tile_n]
            acc = acc + jnp.maximum(neigh + base, 0.0)    # ReLU, sum over k

        out_ref[b] = acc * inv_k                          # mean over k


def edge_conv_noc(feature, knn_inds, w1, w2, bn_gamma, bn_beta, bn_mean, bn_var,
                  eps=1e-5):
    """EdgeConvNoC forward.

    feature  : (B, Cin, N)
    knn_inds : (B, N, K) integer indices into the point dim
    w1, w2   : (Cout, Cin) 1x1 Conv1d weights (bias=False)
    bn_*     : (Cout,) BatchNorm2d parameters / running stats
    returns  : (B, Cout, N) float32
    """
    B, Cin, N = feature.shape
    K = knn_inds.shape[2]
    Cout = w1.shape[0]

    # Fold eval-mode BN scale into both conv weights; fuse them into one
    # (2*Cout, Cin) weight so the kernel needs a single conv matmul.
    scale = (bn_gamma / jnp.sqrt(bn_var + eps)).astype(jnp.float32)
    shift = (bn_beta.astype(jnp.float32) -
             scale * bn_mean.astype(jnp.float32)).reshape(Cout, 1)
    w1f = w1.astype(jnp.float32) * scale[:, None]
    w2f = w2.astype(jnp.float32) * scale[:, None]
    w_cat = jnp.concatenate([w1f, w2f], axis=0)           # (2*Cout, Cin) f32

    # ---- Tiling choices -----------------------------------------------------
    # Batch block: amortizes the ~0.35us per-grid-step overhead. Chosen so the
    # knn block's second-minor dim stays layout-legal (BT == B or BT % 8 == 0).
    if B <= 8 or B % 8 != 0:
        bt = B
    else:
        bt = 8
    nb = B // bt

    # Point tile: keeps the (N, (K+1)*TILE_N) selection matrix bounded in VMEM
    # at large N and gives both v7x TensorCores work even when B is tiny.
    tn = N
    if N % 128 == 0:
        for cand in (512, 256, 128):
            if N % cand == 0:
                tn = cand
                break
    nt = N // tn
    qt = (K + 1) * tn

    # ---- KNN index table preparation (pure XLA, tiny) -----------------------
    # Append the self index as the (K+1)-th selection, then lay the table out
    # tile-major so each grid step gets a contiguous (BT, (K+1)*TN) block with
    # column order q = kk*TN + n (no in-kernel reshapes of the index table).
    knn = knn_inds.astype(jnp.int32)                                   # (B, N, K)
    self_idx = jnp.broadcast_to(
        jnp.arange(N, dtype=jnp.int32)[None, :, None], (B, N, 1))
    knn_aug = jnp.concatenate([knn, self_idx], axis=2)                 # (B, N, K+1)
    knn_blk = (knn_aug.reshape(B, nt, tn, K + 1)
               .transpose(1, 0, 3, 2)                                  # (NT,B,K+1,TN)
               .reshape(nt, B, qt))                                    # (NT,B,(K+1)*TN)

    kernel = functools.partial(_edge_conv_kernel, num_points=N, k=K,
                               tile_n=tn, cout=Cout, bt=bt)

    out = pl.pallas_call(
        kernel,
        out_shape=jax.ShapeDtypeStruct((B, Cout, N), jnp.float32),
        grid_spec=pltpu.PrefetchScalarGridSpec(
            num_scalar_prefetch=0,
            grid=(nb, nt),
            in_specs=[
                pl.BlockSpec((bt, Cin, N), lambda b, j: (b, 0, 0)),    # feature
                pl.BlockSpec((1, bt, qt), lambda b, j: (j, b, 0)),     # knn table
                pl.BlockSpec((2 * Cout, Cin), lambda b, j: (0, 0)),    # fused weights
                pl.BlockSpec((Cout, 1), lambda b, j: (0, 0)),          # BN shift
            ],
            out_specs=pl.BlockSpec((bt, Cout, tn), lambda b, j: (b, 0, j)),
        ),
        compiler_params=pltpu.CompilerParams(
            # Both axes independent: batch blocks and point tiles shard across
            # the two TensorCores on v7x; no-op on single-TC v5e/v6e.
            dimension_semantics=("parallel", "parallel")),
    )(feature, knn_blk, w_cat, shift)
    return out


def _reference(feature, knn_inds, w1, w2, gamma, beta, mean, var, eps=1e-5):
    """Pure-JAX reference mirroring the PyTorch forward (eval-mode BN)."""
    local = jnp.einsum('oc,bcn->bon', w1, feature)
    edge = jnp.einsum('oc,bcn->bon', w2, feature)
    # neighbour[b, o, n, k] = edge[b, o, knn_inds[b, n, k]]
    neighbour = jax.vmap(lambda e, idx: e[:, idx])(edge, knn_inds)  # (B,Cout,N,K)
    central = local[..., None]
    x = neighbour - central
    x = (x - mean[None, :, None, None]) / jnp.sqrt(var[None, :, None, None] + eps)
    x = x * gamma[None, :, None, None] + beta[None, :, None, None]
    x = jnp.maximum(x, 0.0)
    return jnp.mean(x, axis=3)


if __name__ == "__main__":
    key = jax.random.PRNGKey(0)
    k1, k2, k3, k4, k5, k6, k7, k8 = jax.random.split(key, 8)

    B, Cin, Cout, N, K = 2, 4, 32, 128, 8

    feature = jax.random.normal(k1, (B, Cin, N), jnp.float32)
    knn_inds = jax.random.randint(k2, (B, N, K), 0, N, jnp.int32)
    w1 = jax.random.normal(k3, (Cout, Cin), jnp.float32) * 0.3
    w2 = jax.random.normal(k4, (Cout, Cin), jnp.float32) * 0.3
    gamma = jax.random.uniform(k5, (Cout,), jnp.float32, 0.5, 1.5)
    beta = jax.random.normal(k6, (Cout,), jnp.float32) * 0.1
    mean = jax.random.normal(k7, (Cout,), jnp.float32) * 0.1
    var = jax.random.uniform(k8, (Cout,), jnp.float32, 0.5, 1.5)

    out = edge_conv_noc(feature, knn_inds, w1, w2, gamma, beta, mean, var)
    out = jax.block_until_ready(out)

    ref = _reference(feature, knn_inds, w1, w2, gamma, beta, mean, var)
    assert out.shape == (B, Cout, N)
    assert jnp.allclose(out, ref, rtol=1e-4, atol=1e-4), (
        float(jnp.max(jnp.abs(out - ref))))

    print("KERNEL_OK")
</pallas_src>

<mosaic_0001>
module attributes {stable_mosaic.version = 11 : i64} {
  func.func @_edge_conv_kernel(%arg0: i32, %arg1: i32, %arg2: memref<2x4x128xf32, #tpu.memory_space<vmem>>, %arg3: memref<1x2x1152xi32, #tpu.memory_space<vmem>>, %arg4: memref<64x4xf32, #tpu.memory_space<vmem>>, %arg5: memref<32x1xf32, #tpu.memory_space<vmem>>, %arg6: memref<2x32x128xf32, #tpu.memory_space<vmem>>) attributes {dimension_semantics = [#tpu.dimension_semantics<parallel>, #tpu.dimension_semantics<parallel>], iteration_bounds = array<i64: 1, 1>, scalar_prefetch = 0 : i64, scratch_operands = 0 : i64, tpu.core_type = #tpu.core_type<tc>, window_params = [{transform_indices = @transform_0, window_bounds = array<i64: 2, 4, 128>}, {transform_indices = @transform_1, window_bounds = array<i64: 1, 2, 1152>}, {pipeline_mode = #tpu.pipeline_mode<synchronous>, transform_indices = @transform_2, window_bounds = array<i64: 64, 4>}, {pipeline_mode = #tpu.pipeline_mode<synchronous>, transform_indices = @transform_3, window_bounds = array<i64: 32, 1>}, {transform_indices = @transform_4, window_bounds = array<i64: 2, 32, 128>}]} {
    %c0 = arith.constant 0 : index
    %c0_0 = arith.constant 0 : index
    %0 = vector.load %arg4[%c0, %c0_0] : memref<64x4xf32, #tpu.memory_space<vmem>>, vector<64x4xf32>
    %c0_1 = arith.constant 0 : index
    %c0_2 = arith.constant 0 : index
    %1 = vector.load %arg5[%c0_1, %c0_2] : memref<32x1xf32, #tpu.memory_space<vmem>>, vector<32x1xf32>
    %c0_3 = arith.constant 0 : index
    %c0_4 = arith.constant 0 : index
    %c0_5 = arith.constant 0 : index
    %2 = vector.load %arg3[%c0_3, %c0_4, %c0_5] : memref<1x2x1152xi32, #tpu.memory_space<vmem>>, vector<1x2x1152xi32>
    %3 = vector.shape_cast %2 : vector<1x2x1152xi32> to vector<2x1152xi32>
    %4 = tpu.iota {dimensions = array<i32: 0>} : vector<128x1152xi32>
    %c0_6 = arith.constant 0 : index
    %c0_7 = arith.constant 0 : index
    %c0_8 = arith.constant 0 : index
    %5 = vector.load %arg2[%c0_6, %c0_7, %c0_8] : memref<2x4x128xf32, #tpu.memory_space<vmem>>, vector<1x4x128xf32>
    %6 = vector.shape_cast %5 : vector<1x4x128xf32> to vector<4x128xf32>
    %cst = arith.constant dense<0.000000e+00> : vector<64x128xf32>
    %7 = tpu.matmul %0, %6, %cst {dimension_numbers = #tpu.dot_dimension_numbers<[1], [0], [0], [1], [0, 0, 1, 1], [], []>} : vector<64x4xf32>, vector<4x128xf32>, vector<64x128xf32> -> vector<64x128xf32>
    %8 = vector.extract_strided_slice %3 {offsets = [0, 0], sizes = [1, 1152], strides = [1, 1]} : vector<2x1152xi32> to vector<1x1152xi32>
    %9 = vector.broadcast %8 : vector<1x1152xi32> to vector<128x1152xi32>
    %10 = arith.cmpi eq, %4, %9 : vector<128x1152xi32>
    %11 = arith.extui %10 : vector<128x1152xi1> to vector<128x1152xi32>
    %12 = arith.sitofp %11 : vector<128x1152xi32> to vector<128x1152xf32>
    %cst_9 = arith.constant dense<0.000000e+00> : vector<64x1152xf32>
    %13 = tpu.matmul %7, %12, %cst_9 {dimension_numbers = #tpu.dot_dimension_numbers<[1], [0], [0], [1], [0, 0, 1, 1], [], []>} : vector<64x128xf32>, vector<128x1152xf32>, vector<64x1152xf32> -> vector<64x1152xf32>
    %14 = vector.extract_strided_slice %13 {offsets = [0, 1024], sizes = [32, 128], strides = [1, 1]} : vector<64x1152xf32> to vector<32x128xf32>
    %15 = vector.broadcast %1 : vector<32x1xf32> to vector<32x128xf32>
    %16 = arith.subf %15, %14 : vector<32x128xf32>
    %cst_10 = arith.constant 0.000000e+00 : f32
    %17 = vector.broadcast %cst_10 : f32 to vector<32x128xf32>
    %18 = vector.extract_strided_slice %13 {offsets = [32, 0], sizes = [32, 128], strides = [1, 1]} : vector<64x1152xf32> to vector<32x128xf32>
    %19 = arith.addf %18, %16 : vector<32x128xf32>
    %cst_11 = arith.constant 0.000000e+00 : f32
    %20 = vector.broadcast %cst_11 : f32 to vector<32x128xf32>
    %21 = arith.maximumf %19, %20 : vector<32x128xf32>
    %22 = arith.addf %17, %21 : vector<32x128xf32>
    %23 = vector.extract_strided_slice %13 {offsets = [32, 128], sizes = [32, 128], strides = [1, 1]} : vector<64x1152xf32> to vector<32x128xf32>
    %24 = arith.addf %23, %16 : vector<32x128xf32>
    %cst_12 = arith.constant 0.000000e+00 : f32
    %25 = vector.broadcast %cst_12 : f32 to vector<32x128xf32>
    %26 = arith.maximumf %24, %25 : vector<32x128xf32>
    %27 = arith.addf %22, %26 : vector<32x128xf32>
    %28 = vector.extract_strided_slice %13 {offsets = [32, 256], sizes = [32, 128], strides = [1, 1]} : vector<64x1152xf32> to vector<32x128xf32>
    %29 = arith.addf %28, %16 : vector<32x128xf32>
    %cst_13 = arith.constant 0.000000e+00 : f32
    %30 = vector.broadcast %cst_13 : f32 to vector<32x128xf32>
    %31 = arith.maximumf %29, %30 : vector<32x128xf32>
    %32 = arith.addf %27, %31 : vector<32x128xf32>
    %33 = vector.extract_strided_slice %13 {offsets = [32, 384], sizes = [32, 128], strides = [1, 1]} : vector<64x1152xf32> to vector<32x128xf32>
    %34 = arith.addf %33, %16 : vector<32x128xf32>
    %cst_14 = arith.constant 0.000000e+00 : f32
    %35 = vector.broadcast %cst_14 : f32 to vector<32x128xf32>
    %36 = arith.maximumf %34, %35 : vector<32x128xf32>
    %37 = arith.addf %32, %36 : vector<32x128xf32>
    %38 = vector.extract_strided_slice %13 {offsets = [32, 512], sizes = [32, 128], strides = [1, 1]} : vector<64x1152xf32> to vector<32x128xf32>
    %39 = arith.addf %38, %16 : vector<32x128xf32>
    %cst_15 = arith.constant 0.000000e+00 : f32
    %40 = vector.broadcast %cst_15 : f32 to vector<32x128xf32>
    %41 = arith.maximumf %39, %40 : vector<32x128xf32>
    %42 = arith.addf %37, %41 : vector<32x128xf32>
    %43 = vector.extract_strided_slice %13 {offsets = [32, 640], sizes = [32, 128], strides = [1, 1]} : vector<64x1152xf32> to vector<32x128xf32>
    %44 = arith.addf %43, %16 : vector<32x128xf32>
    %cst_16 = arith.constant 0.000000e+00 : f32
    %45 = vector.broadcast %cst_16 : f32 to vector<32x128xf32>
    %46 = arith.maximumf %44, %45 : vector<32x128xf32>
    %47 = arith.addf %42, %46 : vector<32x128xf32>
    %48 = vector.extract_strided_slice %13 {offsets = [32, 768], sizes = [32, 128], strides = [1, 1]} : vector<64x1152xf32> to vector<32x128xf32>
    %49 = arith.addf %48, %16 : vector<32x128xf32>
    %cst_17 = arith.constant 0.000000e+00 : f32
    %50 = vector.broadcast %cst_17 : f32 to vector<32x128xf32>
    %51 = arith.maximumf %49, %50 : vector<32x128xf32>
    %52 = arith.addf %47, %51 : vector<32x128xf32>
    %53 = vector.extract_strided_slice %13 {offsets = [32, 896], sizes = [32, 128], strides = [1, 1]} : vector<64x1152xf32> to vector<32x128xf32>
    %54 = arith.addf %53, %16 : vector<32x128xf32>
    %cst_18 = arith.constant 0.000000e+00 : f32
    %55 = vector.broadcast %cst_18 : f32 to vector<32x128xf32>
    %56 = arith.maximumf %54, %55 : vector<32x128xf32>
    %57 = arith.addf %52, %56 : vector<32x128xf32>
    %cst_19 = arith.constant 1.250000e-01 : f32
    %58 = vector.broadcast %cst_19 : f32 to vector<32x128xf32>
    %59 = arith.mulf %57, %58 : vector<32x128xf32>
    %c0_20 = arith.constant 0 : index
    %c0_21 = arith.constant 0 : index
    %c0_22 = arith.constant 0 : index
    %60 = vector.load %arg6[%c0_20, %c0_21, %c0_22] : memref<2x32x128xf32, #tpu.memory_space<vmem>>, vector<1x32x128xf32>
    %61 = vector.shape_cast %60 : vector<1x32x128xf32> to vector<32x128xf32>
    %62 = vector.shape_cast %59 : vector<32x128xf32> to vector<1x32x128xf32>
    tpu.vector_store %arg6[%c0_20, %c0_21, %c0_22], %62 {strides = array<i32>} : memref<2x32x128xf32, #tpu.memory_space<vmem>>, vector<1x32x128xf32>,
    %c1 = arith.constant 1 : index
    %c0_23 = arith.constant 0 : index
    %c0_24 = arith.constant 0 : index
    %63 = vector.load %arg2[%c1, %c0_23, %c0_24] : memref<2x4x128xf32, #tpu.memory_space<vmem>>, vector<1x4x128xf32>
    %64 = vector.shape_cast %63 : vector<1x4x128xf32> to vector<4x128xf32>
    %cst_25 = arith.constant dense<0.000000e+00> : vector<64x128xf32>
    %65 = tpu.matmul %0, %64, %cst_25 {dimension_numbers = #tpu.dot_dimension_numbers<[1], [0], [0], [1], [0, 0, 1, 1], [], []>} : vector<64x4xf32>, vector<4x128xf32>, vector<64x128xf32> -> vector<64x128xf32>
    %66 = vector.extract_strided_slice %3 {offsets = [1, 0], sizes = [1, 1152], strides = [1, 1]} : vector<2x1152xi32> to vector<1x1152xi32>
    %67 = vector.broadcast %66 : vector<1x1152xi32> to vector<128x1152xi32>
    %68 = arith.cmpi eq, %4, %67 : vector<128x1152xi32>
    %69 = arith.extui %68 : vector<128x1152xi1> to vector<128x1152xi32>
    %70 = arith.sitofp %69 : vector<128x1152xi32> to vector<128x1152xf32>
    %cst_26 = arith.constant dense<0.000000e+00> : vector<64x1152xf32>
    %71 = tpu.matmul %65, %70, %cst_26 {dimension_numbers = #tpu.dot_dimension_numbers<[1], [0], [0], [1], [0, 0, 1, 1], [], []>} : vector<64x128xf32>, vector<128x1152xf32>, vector<64x1152xf32> -> vector<64x1152xf32>
    %72 = vector.extract_strided_slice %71 {offsets = [0, 1024], sizes = [32, 128], strides = [1, 1]} : vector<64x1152xf32> to vector<32x128xf32>
    %73 = vector.broadcast %1 : vector<32x1xf32> to vector<32x128xf32>
    %74 = arith.subf %73, %72 : vector<32x128xf32>
    %cst_27 = arith.constant 0.000000e+00 : f32
    %75 = vector.broadcast %cst_27 : f32 to vector<32x128xf32>
    %76 = vector.extract_strided_slice %71 {offsets = [32, 0], sizes = [32, 128], strides = [1, 1]} : vector<64x1152xf32> to vector<32x128xf32>
    %77 = arith.addf %76, %74 : vector<32x128xf32>
    %cst_28 = arith.constant 0.000000e+00 : f32
    %78 = vector.broadcast %cst_28 : f32 to vector<32x128xf32>
    %79 = arith.maximumf %77, %78 : vector<32x128xf32>
    %80 = arith.addf %75, %79 : vector<32x128xf32>
    %81 = vector.extract_strided_slice %71 {offsets = [32, 128], sizes = [32, 128], strides = [1, 1]} : vector<64x1152xf32> to vector<32x128xf32>
    %82 = arith.addf %81, %74 : vector<32x128xf32>
    %cst_29 = arith.constant 0.000000e+00 : f32
    %83 = vector.broadcast %cst_29 : f32 to vector<32x128xf32>
    %84 = arith.maximumf %82, %83 : vector<32x128xf32>
    %85 = arith.addf %80, %84 : vector<32x128xf32>
    %86 = vector.extract_strided_slice %71 {offsets = [32, 256], sizes = [32, 128], strides = [1, 1]} : vector<64x1152xf32> to vector<32x128xf32>
    %87 = arith.addf %86, %74 : vector<32x128xf32>
    %cst_30 = arith.constant 0.000000e+00 : f32
    %88 = vector.broadcast %cst_30 : f32 to vector<32x128xf32>
    %89 = arith.maximumf %87, %88 : vector<32x128xf32>
    %90 = arith.addf %85, %89 : vector<32x128xf32>
    %91 = vector.extract_strided_slice %71 {offsets = [32, 384], sizes = [32, 128], strides = [1, 1]} : vector<64x1152xf32> to vector<32x128xf32>
    %92 = arith.addf %91, %74 : vector<32x128xf32>
    %cst_31 = arith.constant 0.000000e+00 : f32
    %93 = vector.broadcast %cst_31 : f32 to vector<32x128xf32>
    %94 = arith.maximumf %92, %93 : vector<32x128xf32>
    %95 = arith.addf %90, %94 : vector<32x128xf32>
    %96 = vector.extract_strided_slice %71 {offsets = [32, 512], sizes = [32, 128], strides = [1, 1]} : vector<64x1152xf32> to vector<32x128xf32>
    %97 = arith.addf %96, %74 : vector<32x128xf32>
    %cst_32 = arith.constant 0.000000e+00 : f32
    %98 = vector.broadcast %cst_32 : f32 to vector<32x128xf32>
    %99 = arith.maximumf %97, %98 : vector<32x128xf32>
    %100 = arith.addf %95, %99 : vector<32x128xf32>
    %101 = vector.extract_strided_slice %71 {offsets = [32, 640], sizes = [32, 128], strides = [1, 1]} : vector<64x1152xf32> to vector<32x128xf32>
    %102 = arith.addf %101, %74 : vector<32x128xf32>
    %cst_33 = arith.constant 0.000000e+00 : f32
    %103 = vector.broadcast %cst_33 : f32 to vector<32x128xf32>
    %104 = arith.maximumf %102, %103 : vector<32x128xf32>
    %105 = arith.addf %100, %104 : vector<32x128xf32>
    %106 = vector.extract_strided_slice %71 {offsets = [32, 768], sizes = [32, 128], strides = [1, 1]} : vector<64x1152xf32> to vector<32x128xf32>
    %107 = arith.addf %106, %74 : vector<32x128xf32>
    %cst_34 = arith.constant 0.000000e+00 : f32
    %108 = vector.broadcast %cst_34 : f32 to vector<32x128xf32>
    %109 = arith.maximumf %107, %108 : vector<32x128xf32>
    %110 = arith.addf %105, %109 : vector<32x128xf32>
    %111 = vector.extract_strided_slice %71 {offsets = [32, 896], sizes = [32, 128], strides = [1, 1]} : vector<64x1152xf32> to vector<32x128xf32>
    %112 = arith.addf %111, %74 : vector<32x128xf32>
    %cst_35 = arith.constant 0.000000e+00 : f32
    %113 = vector.broadcast %cst_35 : f32 to vector<32x128xf32>
    %114 = arith.maximumf %112, %113 : vector<32x128xf32>
    %115 = arith.addf %110, %114 : vector<32x128xf32>
    %cst_36 = arith.constant 1.250000e-01 : f32
    %116 = vector.broadcast %cst_36 : f32 to vector<32x128xf32>
    %117 = arith.mulf %115, %116 : vector<32x128xf32>
    %c1_37 = arith.constant 1 : index
    %c0_38 = arith.constant 0 : index
    %c0_39 = arith.constant 0 : index
    %118 = vector.load %arg6[%c1_37, %c0_38, %c0_39] : memref<2x32x128xf32, #tpu.memory_space<vmem>>, vector<1x32x128xf32>
    %119 = vector.shape_cast %118 : vector<1x32x128xf32> to vector<32x128xf32>
    %120 = vector.shape_cast %117 : vector<32x128xf32> to vector<1x32x128xf32>
    tpu.vector_store %arg6[%c1_37, %c0_38, %c0_39], %120 {strides = array<i32>} : memref<2x32x128xf32, #tpu.memory_space<vmem>>, vector<1x32x128xf32>,
    return
  }
  func.func @transform_0(%arg0: i32, %arg1: i32) -> (i32, i32, i32) {
    %c0_i32 = arith.constant 0 : i32
    %c0_i32_0 = arith.constant 0 : i32
    %c0_i32_1 = arith.constant 0 : i32
    return %arg0, %c0_i32, %c0_i32_0 : i32, i32, i32
  }
  func.func @transform_1(%arg0: i32, %arg1: i32) -> (i32, i32, i32) {
    %c0_i32 = arith.constant 0 : i32
    %c0_i32_0 = arith.constant 0 : i32
    return %arg1, %arg0, %c0_i32 : i32, i32, i32
  }
  func.func @transform_2(%arg0: i32, %arg1: i32) -> (i32, i32) {
    %c0_i32 = arith.constant 0 : i32
    %c0_i32_0 = arith.constant 0 : i32
    %c0_i32_1 = arith.constant 0 : i32
    return %c0_i32, %c0_i32_0 : i32, i32
  }
  func.func @transform_3(%arg0: i32, %arg1: i32) -> (i32, i32) {
    %c0_i32 = arith.constant 0 : i32
    %c0_i32_0 = arith.constant 0 : i32
    %c0_i32_1 = arith.constant 0 : i32
    return %c0_i32, %c0_i32_0 : i32, i32
  }
  func.func @transform_4(%arg0: i32, %arg1: i32) -> (i32, i32, i32) {
    %c0_i32 = arith.constant 0 : i32
    %c0_i32_0 = arith.constant 0 : i32
    return %arg0, %c0_i32, %arg1 : i32, i32, i32
  }
}

</mosaic_0001>

<llo_original>
// kernel: tpu_custom_call.1
$region0: #{tpu_custom_call.1}
  #allocation0 [shape = 'u32[]', space=smem, size = 0x4, offset = 0x4, fixed_abs, tag = 'smem constant byte address 0x4 - core index']
  #allocation1 [shape = 'u32[144,128]{1,0:T(1,128)}', space=vmem, size = 0x12000, scoped, tag = 'internal scratch']
  %s0 = inlined_call_operand.vmem [shape: f32[2,4,128], index: 0, kind: input, shape index: {}]
  %s1 = inlined_call_operand.vmem [shape: s32[1,2,1152], index: 1, kind: input, shape index: {}]
  %s2 = inlined_call_operand.vmem [shape: f32[64,4], index: 2, kind: input, shape index: {}]
  %s3 = inlined_call_operand.vmem [shape: f32[32,1], index: 3, kind: input, shape index: {}]
  %s4 = inlined_call_operand.hbm [shape: f32[2,32,128], index: 4, kind: output, shape index: {}]
  %s5 = sld [smem:[#allocation0]]
  $region26: #{tpu_custom_call.1} parent=0
    _
  %s7 = ssub.s32 1, %s5
  %s8 = scalar_select 0, %s7, %s5
  $region1: #{tpu_custom_call.1} parent=0
    #allocation2 [shape = 'u8[32768]{0}', space=vmem, size = 0x8000, scoped, tag = 'output window, operand 0, single buffered']
    #allocation3 [shape = 's32[1]{0}', space=sflag, size = 0x4, scoped, tag = 'scoped memory for tpu_custom_call.1']
    %9 = vsyncpa [#allocation3], 0
    // Predicated region
    $region2: #{tpu_custom_call.1} parent=1 // pred_check
      _
    $region3: #{tpu_custom_call.1} parent=1 // pred_check_branch
      %11 = sbr.rel (0) target = $region5
    $region4: #{tpu_custom_call.1} parent=1 // pred_region
      _
    $region5: #{tpu_custom_call.1} parent=1 // pred_fallthru
      _
    // Predicated region
    $region6: #{tpu_custom_call.1} parent=1 // pred_check
      _
    $region7: #{tpu_custom_call.1} parent=1 // pred_check_branch
      %13 = sbr.rel (0) target = $region9
    $region8: #{tpu_custom_call.1} parent=1 // pred_region
      _
    $region9: #{tpu_custom_call.1} parent=1 // pred_fallthru
      _
    // Predicated region
    $region10: #{tpu_custom_call.1} parent=1 // pred_check
      _
    $region11: #{tpu_custom_call.1} parent=1 // pred_check_branch
      %15 = sbr.rel (0) target = $region13
    $region12: #{tpu_custom_call.1} parent=1 // pred_region
      _
    $region13: #{tpu_custom_call.1} parent=1 // pred_fallthru
      _
    // Predicated region
    $region14: #{tpu_custom_call.1} parent=1 // pred_check
      _
    $region15: #{tpu_custom_call.1} parent=1 // pred_check_branch
      %17 = sbr.rel (0) target = $region17
    $region16: #{tpu_custom_call.1} parent=1 // pred_region
      _
    $region17: #{tpu_custom_call.1} parent=1 // pred_fallthru
      _
    %v18 = vld [vmem:[%s2] sm:$0xff]
    %v19 = vld [vmem:[%s2 + $0x8] sm:$0xff]
    %v20 = vld [vmem:[%s2 + $0x10] sm:$0xff]
    %v21 = vld [vmem:[%s2 + $0x18] sm:$0xff]
    %v22 = vld [vmem:[%s2 + $0x20] sm:$0xff]
    %v23 = vld [vmem:[%s2 + $0x28] sm:$0xff]
    %v24 = vld [vmem:[%s2 + $0x30] sm:$0xff]
    %v25 = vld [vmem:[%s2 + $0x38] sm:$0xff]
    %v26 = vld [vmem:[%s3] sm:$0xff]
    %v27 = vld [vmem:[%s3 + $0x8] sm:$0xff]
    %v28 = vld [vmem:[%s3 + $0x10] sm:$0xff]
    %v29 = vld [vmem:[%s3 + $0x18] sm:$0xff]
    %v30 = vld [vmem:[%s1] sm:$0xff]
    %v31 = vld [vmem:[%s1 + $0x8] sm:$0xff]
    %v32 = vld [vmem:[%s1 + $0x10] sm:$0x3]
    %v33 = vlaneseq
    %v34 = vshrl.u32 %v33, 7
    %v35 = vadd.s32 %v34, 8
    %v36 = vadd.s32 %v34, 16
    %v37 = vadd.s32 %v34, 24
    %v38 = vadd.s32 %v34, 32
    %v39 = vadd.s32 %v34, 40
    %v40 = vadd.s32 %v34, 48
    %v41 = vadd.s32 %v34, 56
    %v42 = vadd.s32 %v34, 64
    %v43 = vadd.s32 %v34, 72
    %v44 = vadd.s32 %v34, 80
    %v45 = vadd.s32 %v34, 88
    %v46 = vadd.s32 %v34, 96
    %v47 = vadd.s32 %v34, 104
    %v48 = vadd.s32 %v34, 112
    %v49 = vadd.s32 %v34, 120
    %v50 = vld [vmem:[%s0] sm:$0xf]
    %vm51 = vcmask 31744
    %v53 = vsel %vm51, %v18, 0
    %v56 = vsel %vm51, %v19, 0
    %v59 = vsel %vm51, %v20, 0
    %v62 = vsel %vm51, %v21, 0
    %v65 = vsel %vm51, %v22, 0
    %v68 = vsel %vm51, %v23, 0
    %v71 = vsel %vm51, %v24, 0
    %v74 = vsel %vm51, %v25, 0
    %vm76 = vcmask 1043456
    %v78 = vsel %vm76, %v50, 0
    %80 = vmatprep.subr.mxu0 0.0
    %81 = vmatpush1.msra.mxu0 %v78
    %82 = vmatprep.subr.mxu0 0.0
    %83 = vmatpush1.msra.mxu0 0.0
    %84 = vmatprep.subr.mxu0 0.0
    %85 = vmatpush1.msra.mxu0 0.0
    %86 = vmatprep.subr.mxu0 0.0
    %87 = vmatpush1.msra.mxu0 0.0
    %88 = vmatprep.subr.mxu0 0.0
    %89 = vmatpush1.msra.mxu0 0.0
    %90 = vmatprep.subr.mxu0 0.0
    %91 = vmatpush1.msra.mxu0 0.0
    %92 = vmatprep.subr.mxu0 0.0
    %93 = vmatpush1.msra.mxu0 0.0
    %94 = vmatprep.subr.mxu0 0.0
    %95 = vmatpush1.msra.mxu0 0.0
    %96 = vmatprep.subr.mxu0 0.0
    %97 = vmatpush1.msra.mxu0 0.0
    %98 = vmatprep.subr.mxu0 0.0
    %99 = vmatpush1.msra.mxu0 0.0
    %100 = vmatprep.subr.mxu0 0.0
    %101 = vmatpush1.msra.mxu0 0.0
    %102 = vmatprep.subr.mxu0 0.0
    %103 = vmatpush1.msra.mxu0 0.0
    %104 = vmatprep.subr.mxu0 0.0
    %105 = vmatpush1.msra.mxu0 0.0
    %106 = vmatprep.subr.mxu0 0.0
    %107 = vmatpush1.msra.mxu0 0.0
    %108 = vmatprep.subr.mxu0 0.0
    %109 = vmatpush1.msra.mxu0 0.0
    %110 = vmatprep.subr.mxu0 0.0
    %111 = vmatpush1.msra.mxu0 0.0
    %112 = vmatprep.subr.mxu0 0.0
    %113 = vmatpush1.msra.mxu0 0.0
    %114 = vmatprep.subr.mxu0 0.0
    %115 = vmatpush1.msra.mxu0 0.0
    %116 = vmatprep.subr.mxu0 0.0
    %117 = vmatpush1.msra.mxu0 0.0
    %118 = vmatprep.subr.mxu0 0.0
    %119 = vmatpush1.msra.mxu0 0.0
    %120 = vmatprep.subr.mxu0 0.0
    %121 = vmatpush1.msra.mxu0 0.0
    %122 = vmatprep.subr.mxu0 0.0
    %123 = vmatpush1.msra.mxu0 0.0
    %124 = vmatprep.subr.mxu0 0.0
    %125 = vmatpush1.msra.mxu0 0.0
    %126 = vmatprep.subr.mxu0 0.0
    %127 = vmatpush1.msra.mxu0 0.0
    %128 = vmatprep.subr.mxu0 0.0
    %129 = vmatpush1.msra.mxu0 0.0
    %130 = vmatprep.subr.mxu0 0.0
    %131 = vmatpush1.msra.mxu0 0.0
    %132 = vmatprep.subr.mxu0 0.0
    %133 = vmatpush1.msra.mxu0 0.0
    %134 = vmatprep.subr.mxu0 0.0
    %135 = vmatpush1.msra.mxu0 0.0
    %136 = vmatprep.subr.mxu0 0.0
    %137 = vmatpush1.msra.mxu0 0.0
    %138 = vmatprep.subr.mxu0 0.0
    %139 = vmatpush1.msra.mxu0 0.0
    %140 = vmatprep.subr.mxu0 0.0
    %141 = vmatpush1.msra.mxu0 0.0
    %142 = vmatprep.subr.mxu0 0.0
    %143 = vmatpush1.msra.mxu0 0.0
    %144 = vmatprep.mubr.f32.mxu0 0.0
    %145 = vmatmul.mubr.f32.gmra.mrb[0].mxu0 %v53
    %v146 = vpop.f32.mrb[0].mxu0
    %v147 = vadd.f32 0.0, %v146
    %v148 = vpop.f32.mrb[0].mxu0
    %149 = vmatprep.mubr.f32.mxu0 0.0
    %150 = vmatmul.mubr.f32.gmra.mrb[0].mxu0 %v56
    %v151 = vpop.f32.mrb[0].mxu0
    %v152 = vadd.f32 0.0, %v151
    %v153 = vpop.f32.mrb[0].mxu0
    %154 = vmatprep.mubr.f32.mxu0 0.0
    %155 = vmatmul.mubr.f32.gmra.mrb[0].mxu0 %v59
    %v156 = vpop.f32.mrb[0].mxu0
    %v157 = vadd.f32 0.0, %v156
    %v158 = vpop.f32.mrb[0].mxu0
    %159 = vmatprep.mubr.f32.mxu0 0.0
    %160 = vmatmul.mubr.f32.gmra.mrb[0].mxu0 %v62
    %v161 = vpop.f32.mrb[0].mxu0
    %v162 = vadd.f32 0.0, %v161
    %v163 = vpop.f32.mrb[0].mxu0
    %164 = vmatprep.mubr.f32.mxu0 0.0
    %165 = vmatmul.mubr.f32.gmra.mrb[0].mxu0 %v65
    %v166 = vpop.f32.mrb[0].mxu0
    %v167 = vadd.f32 0.0, %v166
    %v168 = vpop.f32.mrb[0].mxu0
    %169 = vmatprep.mubr.f32.mxu0 0.0
    %170 = vmatmul.mubr.f32.gmra.mrb[0].mxu0 %v68
    %v171 = vpop.f32.mrb[0].mxu0
    %v172 = vadd.f32 0.0, %v171
    %v173 = vpop.f32.mrb[0].mxu0
    %174 = vmatprep.mubr.f32.mxu0 0.0
    %175 = vmatmul.mubr.f32.gmra.mrb[0].mxu0 %v71
    %v176 = vpop.f32.mrb[0].mxu0
    %v177 = vadd.f32 0.0, %v176
    %v178 = vpop.f32.mrb[0].mxu0
    %179 = vmatprep.mubr.f32.mxu0 0.0
    %180 = vmatmul.mubr.f32.gmra.mrb[0].mxu0 %v74
    %v181 = vpop.f32.mrb[0].mxu0
    %v182 = vadd.f32 0.0, %v181
    %v183 = vpop.f32.mrb[0].mxu0
    %184 = vdwg.mxu0
    %v185 = vlaneseq
    %v186 = vshrl.u32 %v185, 7
    %v187 = vsub.s32 0, %v186
    %v188 = vrot.slane %v30, %v187
    %v189 = vlaneseq
    %v190 = vshrl.u32 %v189, 7
    %v191 = vsub.s32 2, %v190
    %v192 = vrot.slane %v30, %v191
    %v193 = vlaneseq
    %v194 = vshrl.u32 %v193, 7
    %v195 = vsub.s32 4, %v194
    %v196 = vrot.slane %v30, %v195
    %v197 = vlaneseq
    %v198 = vshrl.u32 %v197, 7
    %v199 = vsub.s32 6, %v198
    %v200 = vrot.slane %v30, %v199
    %v201 = vlaneseq
    %v202 = vshrl.u32 %v201, 7
    %v203 = vsub.s32 0, %v202
    %v204 = vrot.slane %v31, %v203
    %v205 = vlaneseq
    %v206 = vshrl.u32 %v205, 7
    %v207 = vsub.s32 2, %v206
    %v208 = vrot.slane %v31, %v207
    %v209 = vlaneseq
    %v210 = vshrl.u32 %v209, 7
    %v211 = vsub.s32 4, %v210
    %v212 = vrot.slane %v31, %v211
    %v213 = vlaneseq
    %v214 = vshrl.u32 %v213, 7
    %v215 = vsub.s32 6, %v214
    %v216 = vrot.slane %v31, %v215
    %v217 = vlaneseq
    %v218 = vshrl.u32 %v217, 7
    %v219 = vsub.s32 0, %v218
    %v220 = vrot.slane %v32, %v219
    %v221 = vlaneseq
    %v222 = vshrl.u32 %v221, 7
    %v223 = vsub.s32 0, %v222
    %v224 = vrot.slane %v188, %v223
    %v225 = vlaneseq
    %v226 = vshrl.u32 %v225, 7
    %v227 = vsub.s32 0, %v226
    %v228 = vrot.slane %v192, %v227
    %v229 = vlaneseq
    %v230 = vshrl.u32 %v229, 7
    %v231 = vsub.s32 0, %v230
    %v232 = vrot.slane %v196, %v231
    %v233 = vlaneseq
    %v234 = vshrl.u32 %v233, 7
    %v235 = vsub.s32 0, %v234
    %v236 = vrot.slane %v200, %v235
    %v237 = vlaneseq
    %v238 = vshrl.u32 %v237, 7
    %v239 = vsub.s32 0, %v238
    %v240 = vrot.slane %v204, %v239
    %v241 = vlaneseq
    %v242 = vshrl.u32 %v241, 7
    %v243 = vsub.s32 0, %v242
    %v244 = vrot.slane %v208, %v243
    %v245 = vlaneseq
    %v246 = vshrl.u32 %v245, 7
    %v247 = vsub.s32 0, %v246
    %v248 = vrot.slane %v212, %v247
    %v249 = vlaneseq
    %v250 = vshrl.u32 %v249, 7
    %v251 = vsub.s32 0, %v250
    %v252 = vrot.slane %v216, %v251
    %v253 = vlaneseq
    %v254 = vshrl.u32 %v253, 7
    %v255 = vsub.s32 0, %v254
    %v256 = vrot.slane %v220, %v255
    %vm257 = vcmp.eq.s32.totalorder %v34, %v224
    %vm258 = vcmp.eq.s32.totalorder %v34, %v228
    %vm259 = vcmp.eq.s32.totalorder %v34, %v232
    %vm260 = vcmp.eq.s32.totalorder %v34, %v236
    %vm261 = vcmp.eq.s32.totalorder %v34, %v240
    %vm262 = vcmp.eq.s32.totalorder %v34, %v244
    %vm263 = vcmp.eq.s32.totalorder %v34, %v248
    %vm264 = vcmp.eq.s32.totalorder %v34, %v252
    %vm265 = vcmp.eq.s32.totalorder %v34, %v256
    %vm266 = vcmp.eq.s32.totalorder %v35, %v224
    %vm267 = vcmp.eq.s32.totalorder %v35, %v228
    %vm268 = vcmp.eq.s32.totalorder %v35, %v232
    %vm269 = vcmp.eq.s32.totalorder %v35, %v236
    %vm270 = vcmp.eq.s32.totalorder %v35, %v240
    %vm271 = vcmp.eq.s32.totalorder %v35, %v244
    %vm272 = vcmp.eq.s32.totalorder %v35, %v248
    %vm273 = vcmp.eq.s32.totalorder %v35, %v252
    %vm274 = vcmp.eq.s32.totalorder %v35, %v256
    %vm275 = vcmp.eq.s32.totalorder %v36, %v224
    %vm276 = vcmp.eq.s32.totalorder %v36, %v228
    %vm277 = vcmp.eq.s32.totalorder %v36, %v232
    %vm278 = vcmp.eq.s32.totalorder %v36, %v236
    %vm279 = vcmp.eq.s32.totalorder %v36, %v240
    %vm280 = vcmp.eq.s32.totalorder %v36, %v244
    %vm281 = vcmp.eq.s32.totalorder %v36, %v248
    %vm282 = vcmp.eq.s32.totalorder %v36, %v252
    %vm283 = vcmp.eq.s32.totalorder %v36, %v256
    %vm284 = vcmp.eq.s32.totalorder %v37, %v224
    %vm285 = vcmp.eq.s32.totalorder %v37, %v228
    %vm286 = vcmp.eq.s32.totalorder %v37, %v232
    %vm287 = vcmp.eq.s32.totalorder %v37, %v236
    %vm288 = vcmp.eq.s32.totalorder %v37, %v240
    %vm289 = vcmp.eq.s32.totalorder %v37, %v244
    %vm290 = vcmp.eq.s32.totalorder %v37, %v248
    %vm291 = vcmp.eq.s32.totalorder %v37, %v252
    %vm292 = vcmp.eq.s32.totalorder %v37, %v256
    %vm293 = vcmp.eq.s32.totalorder %v38, %v224
    %vm294 = vcmp.eq.s32.totalorder %v38, %v228
    %vm295 = vcmp.eq.s32.totalorder %v38, %v232
    %vm296 = vcmp.eq.s32.totalorder %v38, %v236
    %vm297 = vcmp.eq.s32.totalorder %v38, %v240
    %vm298 = vcmp.eq.s32.totalorder %v38, %v244
    %vm299 = vcmp.eq.s32.totalorder %v38, %v248
    %vm300 = vcmp.eq.s32.totalorder %v38, %v252
    %vm301 = vcmp.eq.s32.totalorder %v38, %v256
    %vm302 = vcmp.eq.s32.totalorder %v39, %v224
    %vm303 = vcmp.eq.s32.totalorder %v39, %v228
    %vm304 = vcmp.eq.s32.totalorder %v39, %v232
    %vm305 = vcmp.eq.s32.totalorder %v39, %v236
    %vm306 = vcmp.eq.s32.totalorder %v39, %v240
    %vm307 = vcmp.eq.s32.totalorder %v39, %v244
    %vm308 = vcmp.eq.s32.totalorder %v39, %v248
    %vm309 = vcmp.eq.s32.totalorder %v39, %v252
    %vm310 = vcmp.eq.s32.totalorder %v39, %v256
    %vm311 = vcmp.eq.s32.totalorder %v40, %v224
    %vm312 = vcmp.eq.s32.totalorder %v40, %v228
    %vm313 = vcmp.eq.s32.totalorder %v40, %v232
    %vm314 = vcmp.eq.s32.totalorder %v40, %v236
    %vm315 = vcmp.eq.s32.totalorder %v40, %v240
    %vm316 = vcmp.eq.s32.totalorder %v40, %v244
    %vm317 = vcmp.eq.s32.totalorder %v40, %v248
    %vm318 = vcmp.eq.s32.totalorder %v40, %v252
    %vm319 = vcmp.eq.s32.totalorder %v40, %v256
    %vm320 = vcmp.eq.s32.totalorder %v41, %v224
    %vm321 = vcmp.eq.s32.totalorder %v41, %v228
    %vm322 = vcmp.eq.s32.totalorder %v41, %v232
    %vm323 = vcmp.eq.s32.totalorder %v41, %v236
    %vm324 = vcmp.eq.s32.totalorder %v41, %v240
    %vm325 = vcmp.eq.s32.totalorder %v41, %v244
    %vm326 = vcmp.eq.s32.totalorder %v41, %v248
    %vm327 = vcmp.eq.s32.totalorder %v41, %v252
    %vm328 = vcmp.eq.s32.totalorder %v41, %v256
    %vm329 = vcmp.eq.s32.totalorder %v42, %v224
    %vm330 = vcmp.eq.s32.totalorder %v42, %v228
    %vm331 = vcmp.eq.s32.totalorder %v42, %v232
    %vm332 = vcmp.eq.s32.totalorder %v42, %v236
    %vm333 = vcmp.eq.s32.totalorder %v42, %v240
    %vm334 = vcmp.eq.s32.totalorder %v42, %v244
    %vm335 = vcmp.eq.s32.totalorder %v42, %v248
    %vm336 = vcmp.eq.s32.totalorder %v42, %v252
    %vm337 = vcmp.eq.s32.totalorder %v42, %v256
    %vm338 = vcmp.eq.s32.totalorder %v43, %v224
    %vm339 = vcmp.eq.s32.totalorder %v43, %v228
    %vm340 = vcmp.eq.s32.totalorder %v43, %v232
    %vm341 = vcmp.eq.s32.totalorder %v43, %v236
    %vm342 = vcmp.eq.s32.totalorder %v43, %v240
    %vm343 = vcmp.eq.s32.totalorder %v43, %v244
    %vm344 = vcmp.eq.s32.totalorder %v43, %v248
    %vm345 = vcmp.eq.s32.totalorder %v43, %v252
    %vm346 = vcmp.eq.s32.totalorder %v43, %v256
    %vm347 = vcmp.eq.s32.totalorder %v44, %v224
    %vm348 = vcmp.eq.s32.totalorder %v44, %v228
    %vm349 = vcmp.eq.s32.totalorder %v44, %v232
    %vm350 = vcmp.eq.s32.totalorder %v44, %v236
    %vm351 = vcmp.eq.s32.totalorder %v44, %v240
    %vm352 = vcmp.eq.s32.totalorder %v44, %v244
    %vm353 = vcmp.eq.s32.totalorder %v44, %v248
    %vm354 = vcmp.eq.s32.totalorder %v44, %v252
    %vm355 = vcmp.eq.s32.totalorder %v44, %v256
    %vm356 = vcmp.eq.s32.totalorder %v45, %v224
    %vm357 = vcmp.eq.s32.totalorder %v45, %v228
    %vm358 = vcmp.eq.s32.totalorder %v45, %v232
    %vm359 = vcmp.eq.s32.totalorder %v45, %v236
    %vm360 = vcmp.eq.s32.totalorder %v45, %v240
    %vm361 = vcmp.eq.s32.totalorder %v45, %v244
    %vm362 = vcmp.eq.s32.totalorder %v45, %v248
    %vm363 = vcmp.eq.s32.totalorder %v45, %v252
    %vm364 = vcmp.eq.s32.totalorder %v45, %v256
    %vm365 = vcmp.eq.s32.totalorder %v46, %v224
    %vm366 = vcmp.eq.s32.totalorder %v46, %v228
    %vm367 = vcmp.eq.s32.totalorder %v46, %v232
    %vm368 = vcmp.eq.s32.totalorder %v46, %v236
    %vm369 = vcmp.eq.s32.totalorder %v46, %v240
    %vm370 = vcmp.eq.s32.totalorder %v46, %v244
    %vm371 = vcmp.eq.s32.totalorder %v46, %v248
    %vm372 = vcmp.eq.s32.totalorder %v46, %v252
    %vm373 = vcmp.eq.s32.totalorder %v46, %v256
    %vm374 = vcmp.eq.s32.totalorder %v47, %v224
    %vm375 = vcmp.eq.s32.totalorder %v47, %v228
    %vm376 = vcmp.eq.s32.totalorder %v47, %v232
    %vm377 = vcmp.eq.s32.totalorder %v47, %v236
    %vm378 = vcmp.eq.s32.totalorder %v47, %v240
    %vm379 = vcmp.eq.s32.totalorder %v47, %v244
    %vm380 = vcmp.eq.s32.totalorder %v47, %v248
    %vm381 = vcmp.eq.s32.totalorder %v47, %v252
    %vm382 = vcmp.eq.s32.totalorder %v47, %v256
    %vm383 = vcmp.eq.s32.totalorder %v48, %v224
    %vm384 = vcmp.eq.s32.totalorder %v48, %v228
    %vm385 = vcmp.eq.s32.totalorder %v48, %v232
    %vm386 = vcmp.eq.s32.totalorder %v48, %v236
    %vm387 = vcmp.eq.s32.totalorder %v48, %v240
    %vm388 = vcmp.eq.s32.totalorder %v48, %v244
    %vm389 = vcmp.eq.s32.totalorder %v48, %v248
    %vm390 = vcmp.eq.s32.totalorder %v48, %v252
    %vm391 = vcmp.eq.s32.totalorder %v48, %v256
    %vm392 = vcmp.eq.s32.totalorder %v49, %v224
    %vm393 = vcmp.eq.s32.totalorder %v49, %v228
    %vm394 = vcmp.eq.s32.totalorder %v49, %v232
    %vm395 = vcmp.eq.s32.totalorder %v49, %v236
    %vm396 = vcmp.eq.s32.totalorder %v49, %v240
    %vm397 = vcmp.eq.s32.totalorder %v49, %v244
    %vm398 = vcmp.eq.s32.totalorder %v49, %v248
    %vm399 = vcmp.eq.s32.totalorder %v49, %v252
    %vm400 = vcmp.eq.s32.totalorder %v49, %v256
    %v401 = vsel %vm257, 1, 0
    %v402 = vsel %vm258, 1, 0
    %v403 = vsel %vm259, 1, 0
    %v404 = vsel %vm260, 1, 0
    %v405 = vsel %vm261, 1, 0
    %v406 = vsel %vm262, 1, 0
    %v407 = vsel %vm263, 1, 0
    %v408 = vsel %vm264, 1, 0
    %v409 = vsel %vm265, 1, 0
    %v410 = vsel %vm266, 1, 0
    %v411 = vsel %vm267, 1, 0
    %v412 = vsel %vm268, 1, 0
    %v413 = vsel %vm269, 1, 0
    %v414 = vsel %vm270, 1, 0
    %v415 = vsel %vm271, 1, 0
    %v416 = vsel %vm272, 1, 0
    %v417 = vsel %vm273, 1, 0
    %v418 = vsel %vm274, 1, 0
    %v419 = vsel %vm275, 1, 0
    %v420 = vsel %vm276, 1, 0
    %v421 = vsel %vm277, 1, 0
    %v422 = vsel %vm278, 1, 0
    %v423 = vsel %vm279, 1, 0
    %v424 = vsel %vm280, 1, 0
    %v425 = vsel %vm281, 1, 0
    %v426 = vsel %vm282, 1, 0
    %v427 = vsel %vm283, 1, 0
    %v428 = vsel %vm284, 1, 0
    %v429 = vsel %vm285, 1, 0
    %v430 = vsel %vm286, 1, 0
    %v431 = vsel %vm287, 1, 0
    %v432 = vsel %vm288, 1, 0
    %v433 = vsel %vm289, 1, 0
    %v434 = vsel %vm290, 1, 0
    %v435 = vsel %vm291, 1, 0
    %v436 = vsel %vm292, 1, 0
    %v437 = vsel %vm293, 1, 0
    %v438 = vsel %vm294, 1, 0
    %v439 = vsel %vm295, 1, 0
    %v440 = vsel %vm296, 1, 0
    %v441 = vsel %vm297, 1, 0
    %v442 = vsel %vm298, 1, 0
    %v443 = vsel %vm299, 1, 0
    %v444 = vsel %vm300, 1, 0
    %v445 = vsel %vm301, 1, 0
    %v446 = vsel %vm302, 1, 0
    %v447 = vsel %vm303, 1, 0
    %v448 = vsel %vm304, 1, 0
    %v449 = vsel %vm305, 1, 0
    %v450 = vsel %vm306, 1, 0
    %v451 = vsel %vm307, 1, 0
    %v452 = vsel %vm308, 1, 0
    %v453 = vsel %vm309, 1, 0
    %v454 = vsel %vm310, 1, 0
    %v455 = vsel %vm311, 1, 0
    %v456 = vsel %vm312, 1, 0
    %v457 = vsel %vm313, 1, 0
    %v458 = vsel %vm314, 1, 0
    %v459 = vsel %vm315, 1, 0
    %v460 = vsel %vm316, 1, 0
    %v461 = vsel %vm317, 1, 0
    %v462 = vsel %vm318, 1, 0
    %v463 = vsel %vm319, 1, 0
    %v464 = vsel %vm320, 1, 0
    %v465 = vsel %vm321, 1, 0
    %v466 = vsel %vm322, 1, 0
    %v467 = vsel %vm323, 1, 0
    %v468 = vsel %vm324, 1, 0
    %v469 = vsel %vm325, 1, 0
    %v470 = vsel %vm326, 1, 0
    %v471 = vsel %vm327, 1, 0
    %v472 = vsel %vm328, 1, 0
    %v473 = vsel %vm329, 1, 0
    %v474 = vsel %vm330, 1, 0
    %v475 = vsel %vm331, 1, 0
    %v476 = vsel %vm332, 1, 0
    %v477 = vsel %vm333, 1, 0
    %v478 = vsel %vm334, 1, 0
    %v479 = vsel %vm335, 1, 0
    %v480 = vsel %vm336, 1, 0
    %v481 = vsel %vm337, 1, 0
    %v482 = vsel %vm338, 1, 0
    %v483 = vsel %vm339, 1, 0
    %v484 = vsel %vm340, 1, 0
    %v485 = vsel %vm341, 1, 0
    %v486 = vsel %vm342, 1, 0
    %v487 = vsel %vm343, 1, 0
    %v488 = vsel %vm344, 1, 0
    %v489 = vsel %vm345, 1, 0
    %v490 = vsel %vm346, 1, 0
    %v491 = vsel %vm347, 1, 0
    %v492 = vsel %vm348, 1, 0
    %v493 = vsel %vm349, 1, 0
    %v494 = vsel %vm350, 1, 0
    %v495 = vsel %vm351, 1, 0
    %v496 = vsel %vm352, 1, 0
    %v497 = vsel %vm353, 1, 0
    %v498 = vsel %vm354, 1, 0
    %v499 = vsel %vm355, 1, 0
    %v500 = vsel %vm356, 1, 0
    %v501 = vsel %vm357, 1, 0
    %v502 = vsel %vm358, 1, 0
    %v503 = vsel %vm359, 1, 0
    %v504 = vsel %vm360, 1, 0
    %v505 = vsel %vm361, 1, 0
    %v506 = vsel %vm362, 1, 0
    %v507 = vsel %vm363, 1, 0
    %v508 = vsel %vm364, 1, 0
    %v509 = vsel %vm365, 1, 0
    %v510 = vsel %vm366, 1, 0
    %v511 = vsel %vm367, 1, 0
    %v512 = vsel %vm368, 1, 0
    %v513 = vsel %vm369, 1, 0
    %v514 = vsel %vm370, 1, 0
    %v515 = vsel %vm371, 1, 0
    %v516 = vsel %vm372, 1, 0
    %v517 = vsel %vm373, 1, 0
    %v518 = vsel %vm374, 1, 0
    %v519 = vsel %vm375, 1, 0
    %v520 = vsel %vm376, 1, 0
    %v521 = vsel %vm377, 1, 0
    %v522 = vsel %vm378, 1, 0
    %v523 = vsel %vm379, 1, 0
    %v524 = vsel %vm380, 1, 0
    %v525 = vsel %vm381, 1, 0
    %v526 = vsel %vm382, 1, 0
    %v527 = vsel %vm383, 1, 0
    %v528 = vsel %vm384, 1, 0
    %v529 = vsel %vm385, 1, 0
    %v530 = vsel %vm386, 1, 0
    %v531 = vsel %vm387, 1, 0
    %v532 = vsel %vm388, 1, 0
    %v533 = vsel %vm389, 1, 0
    %v534 = vsel %vm390, 1, 0
    %v535 = vsel %vm391, 1, 0
    %v536 = vsel %vm392, 1, 0
    %v537 = vsel %vm393, 1, 0
    %v538 = vsel %vm394, 1, 0
    %v539 = vsel %vm395, 1, 0
    %v540 = vsel %vm396, 1, 0
    %v541 = vsel %vm397, 1, 0
    %v542 = vsel %vm398, 1, 0
    %v543 = vsel %vm399, 1, 0
    %v544 = vsel %vm400, 1, 0
    %v545 = vcvt.s32.f32 %v401
    %v546 = vcvt.s32.f32 %v402
    %v547 = vcvt.s32.f32 %v403
    %v548 = vcvt.s32.f32 %v404
    %v549 = vcvt.s32.f32 %v405
    %v550 = vcvt.s32.f32 %v406
    %v551 = vcvt.s32.f32 %v407
    %v552 = vcvt.s32.f32 %v408
    %v553 = vcvt.s32.f32 %v409
    %v554 = vcvt.s32.f32 %v410
    %v555 = vcvt.s32.f32 %v411
    %v556 = vcvt.s32.f32 %v412
    %v557 = vcvt.s32.f32 %v413
    %v558 = vcvt.s32.f32 %v414
    %v559 = vcvt.s32.f32 %v415
    %v560 = vcvt.s32.f32 %v416
    %v561 = vcvt.s32.f32 %v417
    %v562 = vcvt.s32.f32 %v418
    %v563 = vcvt.s32.f32 %v419
    %v564 = vcvt.s32.f32 %v420
    %v565 = vcvt.s32.f32 %v421
    %v566 = vcvt.s32.f32 %v422
    %v567 = vcvt.s32.f32 %v423
    %v568 = vcvt.s32.f32 %v424
    %v569 = vcvt.s32.f32 %v425
    %v570 = vcvt.s32.f32 %v426
    %v571 = vcvt.s32.f32 %v427
    %v572 = vcvt.s32.f32 %v428
    %v573 = vcvt.s32.f32 %v429
    %v574 = vcvt.s32.f32 %v430
    %v575 = vcvt.s32.f32 %v431
    %v576 = vcvt.s32.f32 %v432
    %v577 = vcvt.s32.f32 %v433
    %v578 = vcvt.s32.f32 %v434
    %v579 = vcvt.s32.f32 %v435
    %v580 = vcvt.s32.f32 %v436
    %v581 = vcvt.s32.f32 %v437
    %v582 = vcvt.s32.f32 %v438
    %v583 = vcvt.s32.f32 %v439
    %v584 = vcvt.s32.f32 %v440
    %v585 = vcvt.s32.f32 %v441
    %v586 = vcvt.s32.f32 %v442
    %v587 = vcvt.s32.f32 %v443
    %v588 = vcvt.s32.f32 %v444
    %v589 = vcvt.s32.f32 %v445
    %v590 = vcvt.s32.f32 %v446
    %v591 = vcvt.s32.f32 %v447
    %v592 = vcvt.s32.f32 %v448
    %v593 = vcvt.s32.f32 %v449
    %v594 = vcvt.s32.f32 %v450
    %v595 = vcvt.s32.f32 %v451
    %v596 = vcvt.s32.f32 %v452
    %v597 = vcvt.s32.f32 %v453
    %v598 = vcvt.s32.f32 %v454
    %v599 = vcvt.s32.f32 %v455
    %v600 = vcvt.s32.f32 %v456
    %v601 = vcvt.s32.f32 %v457
    %v602 = vcvt.s32.f32 %v458
    %v603 = vcvt.s32.f32 %v459
    %v604 = vcvt.s32.f32 %v460
    %v605 = vcvt.s32.f32 %v461
    %v606 = vcvt.s32.f32 %v462
    %v607 = vcvt.s32.f32 %v463
    %v608 = vcvt.s32.f32 %v464
    %v609 = vcvt.s32.f32 %v465
    %v610 = vcvt.s32.f32 %v466
    %v611 = vcvt.s32.f32 %v467
    %v612 = vcvt.s32.f32 %v468
    %v613 = vcvt.s32.f32 %v469
    %v614 = vcvt.s32.f32 %v470
    %v615 = vcvt.s32.f32 %v471
    %v616 = vcvt.s32.f32 %v472
    %v617 = vcvt.s32.f32 %v473
    %v618 = vcvt.s32.f32 %v474
    %v619 = vcvt.s32.f32 %v475
    %v620 = vcvt.s32.f32 %v476
    %v621 = vcvt.s32.f32 %v477
    %v622 = vcvt.s32.f32 %v478
    %v623 = vcvt.s32.f32 %v479
    %v624 = vcvt.s32.f32 %v480
    %v625 = vcvt.s32.f32 %v481
    %v626 = vcvt.s32.f32 %v482
    %v627 = vcvt.s32.f32 %v483
    %v628 = vcvt.s32.f32 %v484
    %v629 = vcvt.s32.f32 %v485
    %v630 = vcvt.s32.f32 %v486
    %v631 = vcvt.s32.f32 %v487
    %v632 = vcvt.s32.f32 %v488
    %v633 = vcvt.s32.f32 %v489
    %v634 = vcvt.s32.f32 %v490
    %v635 = vcvt.s32.f32 %v491
    %v636 = vcvt.s32.f32 %v492
    %v637 = vcvt.s32.f32 %v493
    %v638 = vcvt.s32.f32 %v494
    %v639 = vcvt.s32.f32 %v495
    %v640 = vcvt.s32.f32 %v496
    %v641 = vcvt.s32.f32 %v497
    %v642 = vcvt.s32.f32 %v498
    %v643 = vcvt.s32.f32 %v499
    %v644 = vcvt.s32.f32 %v500
    %v645 = vcvt.s32.f32 %v501
    %v646 = vcvt.s32.f32 %v502
    %v647 = vcvt.s32.f32 %v503
    %v648 = vcvt.s32.f32 %v504
    %v649 = vcvt.s32.f32 %v505
    %v650 = vcvt.s32.f32 %v506
    %v651 = vcvt.s32.f32 %v507
    %v652 = vcvt.s32.f32 %v508
    %v653 = vcvt.s32.f32 %v509
    %v654 = vcvt.s32.f32 %v510
    %v655 = vcvt.s32.f32 %v511
    %v656 = vcvt.s32.f32 %v512
    %v657 = vcvt.s32.f32 %v513
    %v658 = vcvt.s32.f32 %v514
    %v659 = vcvt.s32.f32 %v515
    %v660 = vcvt.s32.f32 %v516
    %v661 = vcvt.s32.f32 %v517
    %v662 = vcvt.s32.f32 %v518
    %v663 = vcvt.s32.f32 %v519
    %v664 = vcvt.s32.f32 %v520
    %v665 = vcvt.s32.f32 %v521
    %v666 = vcvt.s32.f32 %v522
    %v667 = vcvt.s32.f32 %v523
    %v668 = vcvt.s32.f32 %v524
    %v669 = vcvt.s32.f32 %v525
    %v670 = vcvt.s32.f32 %v526
    %v671 = vcvt.s32.f32 %v527
    %v672 = vcvt.s32.f32 %v528
    %v673 = vcvt.s32.f32 %v529
    %v674 = vcvt.s32.f32 %v530
    %v675 = vcvt.s32.f32 %v531
    %v676 = vcvt.s32.f32 %v532
    %v677 = vcvt.s32.f32 %v533
    %v678 = vcvt.s32.f32 %v534
    %v679 = vcvt.s32.f32 %v535
    %v680 = vcvt.s32.f32 %v536
    %v681 = vcvt.s32.f32 %v537
    %v682 = vcvt.s32.f32 %v538
    %v683 = vcvt.s32.f32 %v539
    %v684 = vcvt.s32.f32 %v540
    %v685 = vcvt.s32.f32 %v541
    %v686 = vcvt.s32.f32 %v542
    %v687 = vcvt.s32.f32 %v543
    %v688 = vcvt.s32.f32 %v544
    %689 = vmatprep.subr.mxu0 %v546
    %690 = vmatpush1.msra.mxu0 %v545
    %691 = vmatprep.subr.mxu0 %v555
    %692 = vmatpush1.msra.mxu0 %v554
    %693 = vmatprep.subr.mxu0 %v564
    %694 = vmatpush1.msra.mxu0 %v563
    %695 = vmatprep.subr.mxu0 %v573
    %696 = vmatpush1.msra.mxu0 %v572
    %697 = vmatprep.subr.mxu0 %v582
    %698 = vmatpush1.msra.mxu0 %v581
    %699 = vmatprep.subr.mxu0 %v591
    %700 = vmatpush1.msra.mxu0 %v590
    %701 = vmatprep.subr.mxu0 %v600
    %702 = vmatpush1.msra.mxu0 %v599
    %703 = vmatprep.subr.mxu0 %v609
    %704 = vmatpush1.msra.mxu0 %v608
    %705 = vmatprep.subr.mxu0 %v618
    %706 = vmatpush1.msra.mxu0 %v617
    %707 = vmatprep.subr.mxu0 %v627
    %708 = vmatpush1.msra.mxu0 %v626
    %709 = vmatprep.subr.mxu0 %v636
    %710 = vmatpush1.msra.mxu0 %v635
    %711 = vmatprep.subr.mxu0 %v645
    %712 = vmatpush1.msra.mxu0 %v644
    %713 = vmatprep.subr.mxu0 %v654
    %714 = vmatpush1.msra.mxu0 %v653
    %715 = vmatprep.subr.mxu0 %v663
    %716 = vmatpush1.msra.mxu0 %v662
    %717 = vmatprep.subr.mxu0 %v672
    %718 = vmatpush1.msra.mxu0 %v671
    %719 = vmatprep.subr.mxu0 %v681
    %720 = vmatpush1.msra.mxu0 %v680
    %721 = vmatprep.subr.mxu0 0.0
    %722 = vmatpush1.msra.mxu0 0.0
    %723 = vmatprep.subr.mxu0 0.0
    %724 = vmatpush1.msra.mxu0 0.0
    %725 = vmatprep.subr.mxu0 0.0
    %726 = vmatpush1.msra.mxu0 0.0
    %727 = vmatprep.subr.mxu0 0.0
    %728 = vmatpush1.msra.mxu0 0.0
    %729 = vmatprep.subr.mxu0 0.0
    %730 = vmatpush1.msra.mxu0 0.0
    %731 = vmatprep.subr.mxu0 0.0
    %732 = vmatpush1.msra.mxu0 0.0
    %733 = vmatprep.subr.mxu0 0.0
    %734 = vmatpush1.msra.mxu0 0.0
    %735 = vmatprep.subr.mxu0 0.0
    %736 = vmatpush1.msra.mxu0 0.0
    %737 = vmatprep.subr.mxu0 0.0
    %738 = vmatpush1.msra.mxu0 0.0
    %739 = vmatprep.subr.mxu0 0.0
    %740 = vmatpush1.msra.mxu0 0.0
    %741 = vmatprep.subr.mxu0 0.0
    %742 = vmatpush1.msra.mxu0 0.0
    %743 = vmatprep.subr.mxu0 0.0
    %744 = vmatpush1.msra.mxu0 0.0
    %745 = vmatprep.subr.mxu0 0.0
    %746 = vmatpush1.msra.mxu0 0.0
    %747 = vmatprep.subr.mxu0 0.0
    %748 = vmatpush1.msra.mxu0 0.0
    %749 = vmatprep.subr.mxu0 0.0
    %750 = vmatpush1.msra.mxu0 0.0
    %751 = vmatprep.subr.mxu0 0.0
    %752 = vmatpush1.msra.mxu0 0.0
    %753 = vmatprep.mubr.f32.mxu0 0.0
    %754 = vmatmul.mubr.f32.gmra.mrb[0].mxu0 %v147
    %v755 = vpop.f32.mrb[0].mxu0
    %v756 = vpop.f32.mrb[0].mxu0
    %757 = vmatprep.mubr.f32.mxu0 0.0
    %758 = vmatmul.mubr.f32.gmra.mrb[0].mxu0 %v152
    %v759 = vpop.f32.mrb[0].mxu0
    %v760 = vpop.f32.mrb[0].mxu0
    %761 = vmatprep.mubr.f32.mxu0 0.0
    %762 = vmatmul.mubr.f32.gmra.mrb[0].mxu0 %v157
    %v763 = vpop.f32.mrb[0].mxu0
    %v764 = vpop.f32.mrb[0].mxu0
    %765 = vmatprep.mubr.f32.mxu0 0.0
    %766 = vmatmul.mubr.f32.gmra.mrb[0].mxu0 %v162
    %v767 = vpop.f32.mrb[0].mxu0
    %v768 = vpop.f32.mrb[0].mxu0
    %769 = vmatprep.mubr.f32.mxu0 0.0
    %770 = vmatmul.mubr.f32.gmra.mrb[0].mxu0 %v167
    %v771 = vpop.f32.mrb[0].mxu0
    %v772 = vadd.f32 0.0, %v771
    %v773 = vpop.f32.mrb[0].mxu0
    %v774 = vadd.f32 0.0, %v773
    %775 = vmatprep.mubr.f32.mxu0 0.0
    %776 = vmatmul.mubr.f32.gmra.mrb[0].mxu0 %v172
    %v777 = vpop.f32.mrb[0].mxu0
    %v778 = vadd.f32 0.0, %v777
    %v779 = vpop.f32.mrb[0].mxu0
    %v780 = vadd.f32 0.0, %v779
    %781 = vmatprep.mubr.f32.mxu0 0.0
    %782 = vmatmul.mubr.f32.gmra.mrb[0].mxu0 %v177
    %v783 = vpop.f32.mrb[0].mxu0
    %v784 = vadd.f32 0.0, %v783
    %v785 = vpop.f32.mrb[0].mxu0
    %v786 = vadd.f32 0.0, %v785
    %787 = vmatprep.mubr.f32.mxu0 0.0
    %788 = vmatmul.mubr.f32.gmra.mrb[0].mxu0 %v182
    %v789 = vpop.f32.mrb[0].mxu0
    %v790 = vadd.f32 0.0, %v789
    %v791 = vpop.f32.mrb[0].mxu0
    %v792 = vadd.f32 0.0, %v791
    %793 = vdwg.mxu0
    %794 = vmatprep.subr.mxu0 %v548
    %795 = vmatpush1.msra.mxu0 %v547
    %796 = vmatprep.subr.mxu0 %v557
    %797 = vmatpush1.msra.mxu0 %v556
    %798 = vmatprep.subr.mxu0 %v566
    %799 = vmatpush1.msra.mxu0 %v565
    %800 = vmatprep.subr.mxu0 %v575
    %801 = vmatpush1.msra.mxu0 %v574
    %802 = vmatprep.subr.mxu0 %v584
    %803 = vmatpush1.msra.mxu0 %v583
    %804 = vmatprep.subr.mxu0 %v593
    %805 = vmatpush1.msra.mxu0 %v592
    %806 = vmatprep.subr.mxu0 %v602
    %807 = vmatpush1.msra.mxu0 %v601
    %808 = vmatprep.subr.mxu0 %v611
    %809 = vmatpush1.msra.mxu0 %v610
    %810 = vmatprep.subr.mxu0 %v620
    %811 = vmatpush1.msra.mxu0 %v619
    %812 = vmatprep.subr.mxu0 %v629
    %813 = vmatpush1.msra.mxu0 %v628
    %814 = vmatprep.subr.mxu0 %v638
    %815 = vmatpush1.msra.mxu0 %v637
    %816 = vmatprep.subr.mxu0 %v647
    %817 = vmatpush1.msra.mxu0 %v646
    %818 = vmatprep.subr.mxu0 %v656
    %819 = vmatpush1.msra.mxu0 %v655
    %820 = vmatprep.subr.mxu0 %v665
    %821 = vmatpush1.msra.mxu0 %v664
    %822 = vmatprep.subr.mxu0 %v674
    %823 = vmatpush1.msra.mxu0 %v673
    %824 = vmatprep.subr.mxu0 %v683
    %825 = vmatpush1.msra.mxu0 %v682
    %826 = vmatprep.subr.mxu0 0.0
    %827 = vmatpush1.msra.mxu0 0.0
    %828 = vmatprep.subr.mxu0 0.0
    %829 = vmatpush1.msra.mxu0 0.0
    %830 = vmatprep.subr.mxu0 0.0
    %831 = vmatpush1.msra.mxu0 0.0
    %832 = vmatprep.subr.mxu0 0.0
    %833 = vmatpush1.msra.mxu0 0.0
    %834 = vmatprep.subr.mxu0 0.0
    %835 = vmatpush1.msra.mxu0 0.0
    %836 = vmatprep.subr.mxu0 0.0
    %837 = vmatpush1.msra.mxu0 0.0
    %838 = vmatprep.subr.mxu0 0.0
    %839 = vmatpush1.msra.mxu0 0.0
    %840 = vmatprep.subr.mxu0 0.0
    %841 = vmatpush1.msra.mxu0 0.0
    %842 = vmatprep.subr.mxu0 0.0
    %843 = vmatpush1.msra.mxu0 0.0
    %844 = vmatprep.subr.mxu0 0.0
    %845 = vmatpush1.msra.mxu0 0.0
    %846 = vmatprep.subr.mxu0 0.0
    %847 = vmatpush1.msra.mxu0 0.0
    %848 = vmatprep.subr.mxu0 0.0
    %849 = vmatpush1.msra.mxu0 0.0
    %850 = vmatprep.subr.mxu0 0.0
    %851 = vmatpush1.msra.mxu0 0.0
    %852 = vmatprep.subr.mxu0 0.0
    %853 = vmatpush1.msra.mxu0 0.0
    %854 = vmatprep.subr.mxu0 0.0
    %855 = vmatpush1.msra.mxu0 0.0
    %856 = vmatprep.subr.mxu0 0.0
    %857 = vmatpush1.msra.mxu0 0.0
    %858 = vmatprep.mubr.f32.mxu0 0.0
    %859 = vmatmul.mubr.f32.gmra.mrb[0].mxu0 %v147
    %v860 = vpop.f32.mrb[0].mxu0
    %v861 = vpop.f32.mrb[0].mxu0
    %862 = vmatprep.mubr.f32.mxu0 0.0
    %863 = vmatmul.mubr.f32.gmra.mrb[0].mxu0 %v152
    %v864 = vpop.f32.mrb[0].mxu0
    %v865 = vpop.f32.mrb[0].mxu0
    %866 = vmatprep.mubr.f32.mxu0 0.0
    %867 = vmatmul.mubr.f32.gmra.mrb[0].mxu0 %v157
    %v868 = vpop.f32.mrb[0].mxu0
    %v869 = vpop.f32.mrb[0].mxu0
    %870 = vmatprep.mubr.f32.mxu0 0.0
    %871 = vmatmul.mubr.f32.gmra.mrb[0].mxu0 %v162
    %v872 = vpop.f32.mrb[0].mxu0
    %v873 = vpop.f32.mrb[0].mxu0
    %874 = vmatprep.mubr.f32.mxu0 0.0
    %875 = vmatmul.mubr.f32.gmra.mrb[0].mxu0 %v167
    %v876 = vpop.f32.mrb[0].mxu0
    %v877 = vadd.f32 0.0, %v876
    %v878 = vpop.f32.mrb[0].mxu0
    %v879 = vadd.f32 0.0, %v878
    %880 = vmatprep.mubr.f32.mxu0 0.0
    %881 = vmatmul.mubr.f32.gmra.mrb[0].mxu0 %v172
    %v882 = vpop.f32.mrb[0].mxu0
    %v883 = vadd.f32 0.0, %v882
    %v884 = vpop.f32.mrb[0].mxu0
    %v885 = vadd.f32 0.0, %v884
    %886 = vmatprep.mubr.f32.mxu0 0.0
    %887 = vmatmul.mubr.f32.gmra.mrb[0].mxu0 %v177
    %v888 = vpop.f32.mrb[0].mxu0
    %v889 = vadd.f32 0.0, %v888
    %v890 = vpop.f32.mrb[0].mxu0
    %v891 = vadd.f32 0.0, %v890
    %892 = vmatprep.mubr.f32.mxu0 0.0
    %893 = vmatmul.mubr.f32.gmra.mrb[0].mxu0 %v182
    %v894 = vpop.f32.mrb[0].mxu0
    %v895 = vadd.f32 0.0, %v894
    %v896 = vpop.f32.mrb[0].mxu0
    %v897 = vadd.f32 0.0, %v896
    %898 = vdwg.mxu0
    %899 = vmatprep.subr.mxu0 %v550
    %900 = vmatpush1.msra.mxu0 %v549
    %901 = vmatprep.subr.mxu0 %v559
    %902 = vmatpush1.msra.mxu0 %v558
    %903 = vmatprep.subr.mxu0 %v568
    %904 = vmatpush1.msra.mxu0 %v567
    %905 = vmatprep.subr.mxu0 %v577
    %906 = vmatpush1.msra.mxu0 %v576
    %907 = vmatprep.subr.mxu0 %v586
    %908 = vmatpush1.msra.mxu0 %v585
    %909 = vmatprep.subr.mxu0 %v595
    %910 = vmatpush1.msra.mxu0 %v594
    %911 = vmatprep.subr.mxu0 %v604
    %912 = vmatpush1.msra.mxu0 %v603
    %913 = vmatprep.subr.mxu0 %v613
    %914 = vmatpush1.msra.mxu0 %v612
    %915 = vmatprep.subr.mxu0 %v622
    %916 = vmatpush1.msra.mxu0 %v621
    %917 = vmatprep.subr.mxu0 %v631
    %918 = vmatpush1.msra.mxu0 %v630
    %919 = vmatprep.subr.mxu0 %v640
    %920 = vmatpush1.msra.mxu0 %v639
    %921 = vmatprep.subr.mxu0 %v649
    %922 = vmatpush1.msra.mxu0 %v648
    %923 = vmatprep.subr.mxu0 %v658
    %924 = vmatpush1.msra.mxu0 %v657
    %925 = vmatprep.subr.mxu0 %v667
    %926 = vmatpush1.msra.mxu0 %v666
    %927 = vmatprep.subr.mxu0 %v676
    %928 = vmatpush1.msra.mxu0 %v675
    %929 = vmatprep.subr.mxu0 %v685
    %930 = vmatpush1.msra.mxu0 %v684
    %931 = vmatprep.subr.mxu0 0.0
    %932 = vmatpush1.msra.mxu0 0.0
    %933 = vmatprep.subr.mxu0 0.0
    %934 = vmatpush1.msra.mxu0 0.0
    %935 = vmatprep.subr.mxu0 0.0
    %936 = vmatpush1.msra.mxu0 0.0
    %937 = vmatprep.subr.mxu0 0.0
    %938 = vmatpush1.msra.mxu0 0.0
    %939 = vmatprep.subr.mxu0 0.0
    %940 = vmatpush1.msra.mxu0 0.0
    %941 = vmatprep.subr.mxu0 0.0
    %942 = vmatpush1.msra.mxu0 0.0
    %943 = vmatprep.subr.mxu0 0.0
    %944 = vmatpush1.msra.mxu0 0.0
    %945 = vmatprep.subr.mxu0 0.0
    %946 = vmatpush1.msra.mxu0 0.0
    %947 = vmatprep.subr.mxu0 0.0
    %948 = vmatpush1.msra.mxu0 0.0
    %949 = vmatprep.subr.mxu0 0.0
    %950 = vmatpush1.msra.mxu0 0.0
    %951 = vmatprep.subr.mxu0 0.0
    %952 = vmatpush1.msra.mxu0 0.0
    %953 = vmatprep.subr.mxu0 0.0
    %954 = vmatpush1.msra.mxu0 0.0
    %955 = vmatprep.subr.mxu0 0.0
    %956 = vmatpush1.msra.mxu0 0.0
    %957 = vmatprep.subr.mxu0 0.0
    %958 = vmatpush1.msra.mxu0 0.0
    %959 = vmatprep.subr.mxu0 0.0
    %960 = vmatpush1.msra.mxu0 0.0
    %961 = vmatprep.subr.mxu0 0.0
    %962 = vmatpush1.msra.mxu0 0.0
    %963 = vmatprep.mubr.f32.mxu0 0.0
    %964 = vmatmul.mubr.f32.gmra.mrb[0].mxu0 %v147
    %v965 = vpop.f32.mrb[0].mxu0
    %v966 = vpop.f32.mrb[0].mxu0
    %967 = vmatprep.mubr.f32.mxu0 0.0
    %968 = vmatmul.mubr.f32.gmra.mrb[0].mxu0 %v152
    %v969 = vpop.f32.mrb[0].mxu0
    %v970 = vpop.f32.mrb[0].mxu0
    %971 = vmatprep.mubr.f32.mxu0 0.0
    %972 = vmatmul.mubr.f32.gmra.mrb[0].mxu0 %v157
    %v973 = vpop.f32.mrb[0].mxu0
    %v974 = vpop.f32.mrb[0].mxu0
    %975 = vmatprep.mubr.f32.mxu0 0.0
    %976 = vmatmul.mubr.f32.gmra.mrb[0].mxu0 %v162
    %v977 = vpop.f32.mrb[0].mxu0
    %v978 = vpop.f32.mrb[0].mxu0
    %979 = vmatprep.mubr.f32.mxu0 0.0
    %980 = vmatmul.mubr.f32.gmra.mrb[0].mxu0 %v167
    %v981 = vpop.f32.mrb[0].mxu0
    %v982 = vadd.f32 0.0, %v981
    %v983 = vpop.f32.mrb[0].mxu0
    %v984 = vadd.f32 0.0, %v983
    %985 = vmatprep.mubr.f32.mxu0 0.0
    %986 = vmatmul.mubr.f32.gmra.mrb[0].mxu0 %v172
    %v987 = vpop.f32.mrb[0].mxu0
    %v988 = vadd.f32 0.0, %v987
    %v989 = vpop.f32.mrb[0].mxu0
    %v990 = vadd.f32 0.0, %v989
    %991 = vmatprep.mubr.f32.mxu0 0.0
    %992 = vmatmul.mubr.f32.gmra.mrb[0].mxu0 %v177
    %v993 = vpop.f32.mrb[0].mxu0
    %v994 = vadd.f32 0.0, %v993
    %v995 = vpop.f32.mrb[0].mxu0
    %v996 = vadd.f32 0.0, %v995
    %997 = vmatprep.mubr.f32.mxu0 0.0
    %998 = vmatmul.mubr.f32.gmra.mrb[0].mxu0 %v182
    %v999 = vpop.f32.mrb[0].mxu0
    %v1000 = vadd.f32 0.0, %v999
    %v1001 = vpop.f32.mrb[0].mxu0
    %v1002 = vadd.f32 0.0, %v1001
    %1003 = vdwg.mxu0
    %1004 = vmatprep.subr.mxu0 %v552
    %1005 = vmatpush1.msra.mxu0 %v551
    %1006 = vmatprep.subr.mxu0 %v561
    %1007 = vmatpush1.msra.mxu0 %v560
    %1008 = vmatprep.subr.mxu0 %v570
    %1009 = vmatpush1.msra.mxu0 %v569
    %1010 = vmatprep.subr.mxu0 %v579
    %1011 = vmatpush1.msra.mxu0 %v578
    %1012 = vmatprep.subr.mxu0 %v588
    %1013 = vmatpush1.msra.mxu0 %v587
    %1014 = vmatprep.subr.mxu0 %v597
    %1015 = vmatpush1.msra.mxu0 %v596
    %1016 = vmatprep.subr.mxu0 %v606
    %1017 = vmatpush1.msra.mxu0 %v605
    %1018 = vmatprep.subr.mxu0 %v615
    %1019 = vmatpush1.msra.mxu0 %v614
    %1020 = vmatprep.subr.mxu0 %v624
    %1021 = vmatpush1.msra.mxu0 %v623
    %1022 = vmatprep.subr.mxu0 %v633
    %1023 = vmatpush1.msra.mxu0 %v632
    %1024 = vmatprep.subr.mxu0 %v642
    %1025 = vmatpush1.msra.mxu0 %v641
    %1026 = vmatprep.subr.mxu0 %v651
    %1027 = vmatpush1.msra.mxu0 %v650
    %1028 = vmatprep.subr.mxu0 %v660
    %1029 = vmatpush1.msra.mxu0 %v659
    %1030 = vmatprep.subr.mxu0 %v669
    %1031 = vmatpush1.msra.mxu0 %v668
    %1032 = vmatprep.subr.mxu0 %v678
    %1033 = vmatpush1.msra.mxu0 %v677
    %1034 = vmatprep.subr.mxu0 %v687
    %1035 = vmatpush1.msra.mxu0 %v686
    %1036 = vmatprep.subr.mxu0 0.0
    %1037 = vmatpush1.msra.mxu0 0.0
    %1038 = vmatprep.subr.mxu0 0.0
    %1039 = vmatpush1.msra.mxu0 0.0
    %1040 = vmatprep.subr.mxu0 0.0
    %1041 = vmatpush1.msra.mxu0 0.0
    %1042 = vmatprep.subr.mxu0 0.0
    %1043 = vmatpush1.msra.mxu0 0.0
    %1044 = vmatprep.subr.mxu0 0.0
    %1045 = vmatpush1.msra.mxu0 0.0
    %1046 = vmatprep.subr.mxu0 0.0
    %1047 = vmatpush1.msra.mxu0 0.0
    %1048 = vmatprep.subr.mxu0 0.0
    %1049 = vmatpush1.msra.mxu0 0.0
    %1050 = vmatprep.subr.mxu0 0.0
    %1051 = vmatpush1.msra.mxu0 0.0
    %1052 = vmatprep.subr.mxu0 0.0
    %1053 = vmatpush1.msra.mxu0 0.0
    %1054 = vmatprep.subr.mxu0 0.0
    %1055 = vmatpush1.msra.mxu0 0.0
    %1056 = vmatprep.subr.mxu0 0.0
    %1057 = vmatpush1.msra.mxu0 0.0
    %1058 = vmatprep.subr.mxu0 0.0
    %1059 = vmatpush1.msra.mxu0 0.0
    %1060 = vmatprep.subr.mxu0 0.0
    %1061 = vmatpush1.msra.mxu0 0.0
    %1062 = vmatprep.subr.mxu0 0.0
    %1063 = vmatpush1.msra.mxu0 0.0
    %1064 = vmatprep.subr.mxu0 0.0
    %1065 = vmatpush1.msra.mxu0 0.0
    %1066 = vmatprep.subr.mxu0 0.0
    %1067 = vmatpush1.msra.mxu0 0.0
    %1068 = vmatprep.mubr.f32.mxu0 0.0
    %1069 = vmatmul.mubr.f32.gmra.mrb[0].mxu0 %v147
    %v1070 = vpop.f32.mrb[0].mxu0
    %v1071 = vpop.f32.mrb[0].mxu0
    %1072 = vmatprep.mubr.f32.mxu0 0.0
    %1073 = vmatmul.mubr.f32.gmra.mrb[0].mxu0 %v152
    %v1074 = vpop.f32.mrb[0].mxu0
    %v1075 = vpop.f32.mrb[0].mxu0
    %1076 = vmatprep.mubr.f32.mxu0 0.0
    %1077 = vmatmul.mubr.f32.gmra.mrb[0].mxu0 %v157
    %v1078 = vpop.f32.mrb[0].mxu0
    %v1079 = vpop.f32.mrb[0].mxu0
    %1080 = vmatprep.mubr.f32.mxu0 0.0
    %1081 = vmatmul.mubr.f32.gmra.mrb[0].mxu0 %v162
    %v1082 = vpop.f32.mrb[0].mxu0
    %v1083 = vpop.f32.mrb[0].mxu0
    %1084 = vmatprep.mubr.f32.mxu0 0.0
    %1085 = vmatmul.mubr.f32.gmra.mrb[0].mxu0 %v167
    %v1086 = vpop.f32.mrb[0].mxu0
    %v1087 = vadd.f32 0.0, %v1086
    %v1088 = vpop.f32.mrb[0].mxu0
    %v1089 = vadd.f32 0.0, %v1088
    %1090 = vmatprep.mubr.f32.mxu0 0.0
    %1091 = vmatmul.mubr.f32.gmra.mrb[0].mxu0 %v172
    %v1092 = vpop.f32.mrb[0].mxu0
    %v1093 = vadd.f32 0.0, %v1092
    %v1094 = vpop.f32.mrb[0].mxu0
    %v1095 = vadd.f32 0.0, %v1094
    %1096 = vmatprep.mubr.f32.mxu0 0.0
    %1097 = vmatmul.mubr.f32.gmra.mrb[0].mxu0 %v177
    %v1098 = vpop.f32.mrb[0].mxu0
    %v1099 = vadd.f32 0.0, %v1098
    %v1100 = vpop.f32.mrb[0].mxu0
    %v1101 = vadd.f32 0.0, %v1100
    %1102 = vmatprep.mubr.f32.mxu0 0.0
    %1103 = vmatmul.mubr.f32.gmra.mrb[0].mxu0 %v182
    %v1104 = vpop.f32.mrb[0].mxu0
    %v1105 = vadd.f32 0.0, %v1104
    %v1106 = vpop.f32.mrb[0].mxu0
    %v1107 = vadd.f32 0.0, %v1106
    %1108 = vdwg.mxu0
    %1109 = vmatprep.subr.mxu0 0.0
    %1110 = vmatpush1.msra.mxu0 %v553
    %1111 = vmatprep.subr.mxu0 0.0
    %1112 = vmatpush1.msra.mxu0 %v562
    %1113 = vmatprep.subr.mxu0 0.0
    %1114 = vmatpush1.msra.mxu0 %v571
    %1115 = vmatprep.subr.mxu0 0.0
    %1116 = vmatpush1.msra.mxu0 %v580
    %1117 = vmatprep.subr.mxu0 0.0
    %1118 = vmatpush1.msra.mxu0 %v589
    %1119 = vmatprep.subr.mxu0 0.0
    %1120 = vmatpush1.msra.mxu0 %v598
    %1121 = vmatprep.subr.mxu0 0.0
    %1122 = vmatpush1.msra.mxu0 %v607
    %1123 = vmatprep.subr.mxu0 0.0
    %1124 = vmatpush1.msra.mxu0 %v616
    %1125 = vmatprep.subr.mxu0 0.0
    %1126 = vmatpush1.msra.mxu0 %v625
    %1127 = vmatprep.subr.mxu0 0.0
    %1128 = vmatpush1.msra.mxu0 %v634
    %1129 = vmatprep.subr.mxu0 0.0
    %1130 = vmatpush1.msra.mxu0 %v643
    %1131 = vmatprep.subr.mxu0 0.0
    %1132 = vmatpush1.msra.mxu0 %v652
    %1133 = vmatprep.subr.mxu0 0.0
    %1134 = vmatpush1.msra.mxu0 %v661
    %1135 = vmatprep.subr.mxu0 0.0
    %1136 = vmatpush1.msra.mxu0 %v670
    %1137 = vmatprep.subr.mxu0 0.0
    %1138 = vmatpush1.msra.mxu0 %v679
    %1139 = vmatprep.subr.mxu0 0.0
    %1140 = vmatpush1.msra.mxu0 %v688
    %1141 = vmatprep.subr.mxu0 0.0
    %1142 = vmatpush1.msra.mxu0 0.0
    %1143 = vmatprep.subr.mxu0 0.0
    %1144 = vmatpush1.msra.mxu0 0.0
    %1145 = vmatprep.subr.mxu0 0.0
    %1146 = vmatpush1.msra.mxu0 0.0
    %1147 = vmatprep.subr.mxu0 0.0
    %1148 = vmatpush1.msra.mxu0 0.0
    %1149 = vmatprep.subr.mxu0 0.0
    %1150 = vmatpush1.msra.mxu0 0.0
    %1151 = vmatprep.subr.mxu0 0.0
    %1152 = vmatpush1.msra.mxu0 0.0
    %1153 = vmatprep.subr.mxu0 0.0
    %1154 = vmatpush1.msra.mxu0 0.0
    %1155 = vmatprep.subr.mxu0 0.0
    %1156 = vmatpush1.msra.mxu0 0.0
    %1157 = vmatprep.subr.mxu0 0.0
    %1158 = vmatpush1.msra.mxu0 0.0
    %1159 = vmatprep.subr.mxu0 0.0
    %1160 = vmatpush1.msra.mxu0 0.0
    %1161 = vmatprep.subr.mxu0 0.0
    %1162 = vmatpush1.msra.mxu0 0.0
    %1163 = vmatprep.subr.mxu0 0.0
    %1164 = vmatpush1.msra.mxu0 0.0
    %1165 = vmatprep.subr.mxu0 0.0
    %1166 = vmatpush1.msra.mxu0 0.0
    %1167 = vmatprep.subr.mxu0 0.0
    %1168 = vmatpush1.msra.mxu0 0.0
    %1169 = vmatprep.subr.mxu0 0.0
    %1170 = vmatpush1.msra.mxu0 0.0
    %1171 = vmatprep.subr.mxu0 0.0
    %1172 = vmatpush1.msra.mxu0 0.0
    %1173 = vmatprep.mubr.f32.mxu0 0.0
    %1174 = vmatmul.mubr.f32.gmra.mrb[0].mxu0 %v147
    %v1175 = vpop.f32.mrb[0].mxu0
    %v1176 = vadd.f32 0.0, %v1175
    %v1177 = vpop.f32.mrb[0].mxu0
    %1178 = vmatprep.mubr.f32.mxu0 0.0
    %1179 = vmatmul.mubr.f32.gmra.mrb[0].mxu0 %v152
    %v1180 = vpop.f32.mrb[0].mxu0
    %v1181 = vadd.f32 0.0, %v1180
    %v1182 = vpop.f32.mrb[0].mxu0
    %1183 = vmatprep.mubr.f32.mxu0 0.0
    %1184 = vmatmul.mubr.f32.gmra.mrb[0].mxu0 %v157
    %v1185 = vpop.f32.mrb[0].mxu0
    %v1186 = vadd.f32 0.0, %v1185
    %v1187 = vpop.f32.mrb[0].mxu0
    %1188 = vmatprep.mubr.f32.mxu0 0.0
    %1189 = vmatmul.mubr.f32.gmra.mrb[0].mxu0 %v162
    %v1190 = vpop.f32.mrb[0].mxu0
    %v1191 = vadd.f32 0.0, %v1190
    %v1192 = vpop.f32.mrb[0].mxu0
    %1193 = vmatprep.mubr.f32.mxu0 0.0
    %1194 = vmatmul.mubr.f32.gmra.mrb[0].mxu0 %v167
    %v1195 = vpop.f32.mrb[0].mxu0
    %v1196 = vpop.f32.mrb[0].mxu0
    %1197 = vmatprep.mubr.f32.mxu0 0.0
    %1198 = vmatmul.mubr.f32.gmra.mrb[0].mxu0 %v172
    %v1199 = vpop.f32.mrb[0].mxu0
    %v1200 = vpop.f32.mrb[0].mxu0
    %1201 = vmatprep.mubr.f32.mxu0 0.0
    %1202 = vmatmul.mubr.f32.gmra.mrb[0].mxu0 %v177
    %v1203 = vpop.f32.mrb[0].mxu0
    %v1204 = vpop.f32.mrb[0].mxu0
    %1205 = vmatprep.mubr.f32.mxu0 0.0
    %1206 = vmatmul.mubr.f32.gmra.mrb[0].mxu0 %v182
    %v1207 = vpop.f32.mrb[0].mxu0
    %v1208 = vpop.f32.mrb[0].mxu0
    %1209 = vdwg.mxu0
    %1211 = vset.pattern.permute.xlu0 0
    %1212 = vperm.xlu0 %1211, %v26
    %v1213 = vpop.permute.xlu0 %1212
    %1216 = vset.pattern.permute.xlu0 0
    %1217 = vperm.xlu0 %1216, %v27
    %v1218 = vpop.permute.xlu0 %1217
    %1221 = vset.pattern.permute.xlu0 0
    %1222 = vperm.xlu0 %1221, %v28
    %v1223 = vpop.permute.xlu0 %1222
    %1226 = vset.pattern.permute.xlu0 0
    %1227 = vperm.xlu0 %1226, %v29
    %v1228 = vpop.permute.xlu0 %1227
    %v1230 = vsub.f32 %v1213, %v1176
    %v1231 = vsub.f32 %v1218, %v1181
    %v1232 = vsub.f32 %v1223, %v1186
    %v1233 = vsub.f32 %v1228, %v1191
    %v1234 = vadd.f32 %v772, %v1230
    %v1235 = vadd.f32 %v778, %v1231
    %v1236 = vadd.f32 %v784, %v1232
    %v1237 = vadd.f32 %v790, %v1233
    %v1238 = vmax.f32 %v1234, 0.0
    %v1239 = vmax.f32 %v1235, 0.0
    %v1240 = vmax.f32 %v1236, 0.0
    %v1241 = vmax.f32 %v1237, 0.0
    %v1242 = vadd.f32 %v1238, 0.0
    %v1243 = vadd.f32 %v1239, 0.0
    %v1244 = vadd.f32 %v1240, 0.0
    %v1245 = vadd.f32 %v1241, 0.0
    %v1246 = vadd.f32 %v774, %v1230
    %v1247 = vadd.f32 %v780, %v1231
    %v1248 = vadd.f32 %v786, %v1232
    %v1249 = vadd.f32 %v792, %v1233
    %v1250 = vmax.f32 %v1246, 0.0
    %v1251 = vmax.f32 %v1247, 0.0
    %v1252 = vmax.f32 %v1248, 0.0
    %v1253 = vmax.f32 %v1249, 0.0
    %v1254 = vadd.f32 %v1242, %v1250
    %v1255 = vadd.f32 %v1243, %v1251
    %v1256 = vadd.f32 %v1244, %v1252
    %v1257 = vadd.f32 %v1245, %v1253
    %v1258 = vadd.f32 %v877, %v1230
    %v1259 = vadd.f32 %v883, %v1231
    %v1260 = vadd.f32 %v889, %v1232
    %v1261 = vadd.f32 %v895, %v1233
    %v1262 = vmax.f32 %v1258, 0.0
    %v1263 = vmax.f32 %v1259, 0.0
    %v1264 = vmax.f32 %v1260, 0.0
    %v1265 = vmax.f32 %v1261, 0.0
    %v1266 = vadd.f32 %v1254, %v1262
    %v1267 = vadd.f32 %v1255, %v1263
    %v1268 = vadd.f32 %v1256, %v1264
    %v1269 = vadd.f32 %v1257, %v1265
    %v1270 = vadd.f32 %v879, %v1230
    %v1271 = vadd.f32 %v885, %v1231
    %v1272 = vadd.f32 %v891, %v1232
    %v1273 = vadd.f32 %v897, %v1233
    %v1274 = vmax.f32 %v1270, 0.0
    %v1275 = vmax.f32 %v1271, 0.0
    %v1276 = vmax.f32 %v1272, 0.0
    %v1277 = vmax.f32 %v1273, 0.0
    %v1278 = vadd.f32 %v1266, %v1274
    %v1279 = vadd.f32 %v1267, %v1275
    %v1280 = vadd.f32 %v1268, %v1276
    %v1281 = vadd.f32 %v1269, %v1277
    %v1282 = vadd.f32 %v982, %v1230
    %v1283 = vadd.f32 %v988, %v1231
    %v1284 = vadd.f32 %v994, %v1232
    %v1285 = vadd.f32 %v1000, %v1233
    %v1286 = vmax.f32 %v1282, 0.0
    %v1287 = vmax.f32 %v1283, 0.0
    %v1288 = vmax.f32 %v1284, 0.0
    %v1289 = vmax.f32 %v1285, 0.0
    %v1290 = vadd.f32 %v1278, %v1286
    %v1291 = vadd.f32 %v1279, %v1287
    %v1292 = vadd.f32 %v1280, %v1288
    %v1293 = vadd.f32 %v1281, %v1289
    %v1294 = vadd.f32 %v984, %v1230
    %v1295 = vadd.f32 %v990, %v1231
    %v1296 = vadd.f32 %v996, %v1232
    %v1297 = vadd.f32 %v1002, %v1233
    %v1298 = vmax.f32 %v1294, 0.0
    %v1299 = vmax.f32 %v1295, 0.0
    %v1300 = vmax.f32 %v1296, 0.0
    %v1301 = vmax.f32 %v1297, 0.0
    %v1302 = vadd.f32 %v1290, %v1298
    %v1303 = vadd.f32 %v1291, %v1299
    %v1304 = vadd.f32 %v1292, %v1300
    %v1305 = vadd.f32 %v1293, %v1301
    %v1306 = vadd.f32 %v1087, %v1230
    %v1307 = vadd.f32 %v1093, %v1231
    %v1308 = vadd.f32 %v1099, %v1232
    %v1309 = vadd.f32 %v1105, %v1233
    %v1310 = vmax.f32 %v1306, 0.0
    %v1311 = vmax.f32 %v1307, 0.0
    %v1312 = vmax.f32 %v1308, 0.0
    %v1313 = vmax.f32 %v1309, 0.0
    %v1314 = vadd.f32 %v1302, %v1310
    %v1315 = vadd.f32 %v1303, %v1311
    %v1316 = vadd.f32 %v1304, %v1312
    %v1317 = vadd.f32 %v1305, %v1313
    %v1318 = vadd.f32 %v1089, %v1230
    %v1319 = vadd.f32 %v1095, %v1231
    %v1320 = vadd.f32 %v1101, %v1232
    %v1321 = vadd.f32 %v1107, %v1233
    %v1322 = vmax.f32 %v1318, 0.0
    %v1323 = vmax.f32 %v1319, 0.0
    %v1324 = vmax.f32 %v1320, 0.0
    %v1325 = vmax.f32 %v1321, 0.0
    %v1326 = vadd.f32 %v1314, %v1322
    %v1327 = vadd.f32 %v1315, %v1323
    %v1328 = vadd.f32 %v1316, %v1324
    %v1329 = vadd.f32 %v1317, %v1325
    %v1330 = vmul.f32 %v1326, 0.125
    %v1331 = vmul.f32 %v1327, 0.125
    %v1332 = vmul.f32 %v1328, 0.125
    %v1333 = vmul.f32 %v1329, 0.125
    %1334 = vst [vmem:[#allocation2] sm:$0xff] %v1330
    %1335 = vst [vmem:[#allocation2 + $0x8] sm:$0xff] %v1331
    %1336 = vst [vmem:[#allocation2 + $0x10] sm:$0xff] %v1332
    %1337 = vst [vmem:[#allocation2 + $0x18] sm:$0xff] %v1333
    %s1338 = scalar_lea.vmem %s0, 4
    %v1339 = vld [vmem:[%s1338] sm:$0xf]
    %v1341 = vsel %vm76, %v1339, 0
    %1343 = vmatprep.subr.mxu0 0.0
    %1344 = vmatpush1.msra.mxu0 %v1341
    %1345 = vmatprep.subr.mxu0 0.0
    %1346 = vmatpush1.msra.mxu0 0.0
    %1347 = vmatprep.subr.mxu0 0.0
    %1348 = vmatpush1.msra.mxu0 0.0
    %1349 = vmatprep.subr.mxu0 0.0
    %1350 = vmatpush1.msra.mxu0 0.0
    %1351 = vmatprep.subr.mxu0 0.0
    %1352 = vmatpush1.msra.mxu0 0.0
    %1353 = vmatprep.subr.mxu0 0.0
    %1354 = vmatpush1.msra.mxu0 0.0
    %1355 = vmatprep.subr.mxu0 0.0
    %1356 = vmatpush1.msra.mxu0 0.0
    %1357 = vmatprep.subr.mxu0 0.0
    %1358 = vmatpush1.msra.mxu0 0.0
    %1359 = vmatprep.subr.mxu0 0.0
    %1360 = vmatpush1.msra.mxu0 0.0
    %1361 = vmatprep.subr.mxu0 0.0
    %1362 = vmatpush1.msra.mxu0 0.0
    %1363 = vmatprep.subr.mxu0 0.0
    %1364 = vmatpush1.msra.mxu0 0.0
    %1365 = vmatprep.subr.mxu0 0.0
    %1366 = vmatpush1.msra.mxu0 0.0
    %1367 = vmatprep.subr.mxu0 0.0
    %1368 = vmatpush1.msra.mxu0 0.0
    %1369 = vmatprep.subr.mxu0 0.0
    %1370 = vmatpush1.msra.mxu0 0.0
    %1371 = vmatprep.subr.mxu0 0.0
    %1372 = vmatpush1.msra.mxu0 0.0
    %1373 = vmatprep.subr.mxu0 0.0
    %1374 = vmatpush1.msra.mxu0 0.0
    %1375 = vmatprep.subr.mxu0 0.0
    %1376 = vmatpush1.msra.mxu0 0.0
    %1377 = vmatprep.subr.mxu0 0.0
    %1378 = vmatpush1.msra.mxu0 0.0
    %1379 = vmatprep.subr.mxu0 0.0
    %1380 = vmatpush1.msra.mxu0 0.0
    %1381 = vmatprep.subr.mxu0 0.0
    %1382 = vmatpush1.msra.mxu0 0.0
    %1383 = vmatprep.subr.mxu0 0.0
    %1384 = vmatpush1.msra.mxu0 0.0
    %1385 = vmatprep.subr.mxu0 0.0
    %1386 = vmatpush1.msra.mxu0 0.0
    %1387 = vmatprep.subr.mxu0 0.0
    %1388 = vmatpush1.msra.mxu0 0.0
    %1389 = vmatprep.subr.mxu0 0.0
    %1390 = vmatpush1.msra.mxu0 0.0
    %1391 = vmatprep.subr.mxu0 0.0
    %1392 = vmatpush1.msra.mxu0 0.0
    %1393 = vmatprep.subr.mxu0 0.0
    %1394 = vmatpush1.msra.mxu0 0.0
    %1395 = vmatprep.subr.mxu0 0.0
    %1396 = vmatpush1.msra.mxu0 0.0
    %1397 = vmatprep.subr.mxu0 0.0
    %1398 = vmatpush1.msra.mxu0 0.0
    %1399 = vmatprep.subr.mxu0 0.0
    %1400 = vmatpush1.msra.mxu0 0.0
    %1401 = vmatprep.subr.mxu0 0.0
    %1402 = vmatpush1.msra.mxu0 0.0
    %1403 = vmatprep.subr.mxu0 0.0
    %1404 = vmatpush1.msra.mxu0 0.0
    %1405 = vmatprep.subr.mxu0 0.0
    %1406 = vmatpush1.msra.mxu0 0.0
    %1407 = vmatprep.mubr.f32.mxu0 0.0
    %1408 = vmatmul.mubr.f32.gmra.mrb[0].mxu0 %v53
    %v1409 = vpop.f32.mrb[0].mxu0
    %v1410 = vadd.f32 0.0, %v1409
    %v1411 = vpop.f32.mrb[0].mxu0
    %1412 = vmatprep.mubr.f32.mxu0 0.0
    %1413 = vmatmul.mubr.f32.gmra.mrb[0].mxu0 %v56
    %v1414 = vpop.f32.mrb[0].mxu0
    %v1415 = vadd.f32 0.0, %v1414
    %v1416 = vpop.f32.mrb[0].mxu0
    %1417 = vmatprep.mubr.f32.mxu0 0.0
    %1418 = vmatmul.mubr.f32.gmra.mrb[0].mxu0 %v59
    %v1419 = vpop.f32.mrb[0].mxu0
    %v1420 = vadd.f32 0.0, %v1419
    %v1421 = vpop.f32.mrb[0].mxu0
    %1422 = vmatprep.mubr.f32.mxu0 0.0
    %1423 = vmatmul.mubr.f32.gmra.mrb[0].mxu0 %v62
    %v1424 = vpop.f32.mrb[0].mxu0
    %v1425 = vadd.f32 0.0, %v1424
    %v1426 = vpop.f32.mrb[0].mxu0
    %1427 = vmatprep.mubr.f32.mxu0 0.0
    %1428 = vmatmul.mubr.f32.gmra.mrb[0].mxu0 %v65
    %v1429 = vpop.f32.mrb[0].mxu0
    %v1430 = vadd.f32 0.0, %v1429
    %v1431 = vpop.f32.mrb[0].mxu0
    %1432 = vmatprep.mubr.f32.mxu0 0.0
    %1433 = vmatmul.mubr.f32.gmra.mrb[0].mxu0 %v68
    %v1434 = vpop.f32.mrb[0].mxu0
    %v1435 = vadd.f32 0.0, %v1434
    %v1436 = vpop.f32.mrb[0].mxu0
    %1437 = vmatprep.mubr.f32.mxu0 0.0
    %1438 = vmatmul.mubr.f32.gmra.mrb[0].mxu0 %v71
    %v1439 = vpop.f32.mrb[0].mxu0
    %v1440 = vadd.f32 0.0, %v1439
    %v1441 = vpop.f32.mrb[0].mxu0
    %1442 = vmatprep.mubr.f32.mxu0 0.0
    %1443 = vmatmul.mubr.f32.gmra.mrb[0].mxu0 %v74
    %v1444 = vpop.f32.mrb[0].mxu0
    %v1445 = vadd.f32 0.0, %v1444
    %v1446 = vpop.f32.mrb[0].mxu0
    %1447 = vdwg.mxu0
    %v1448 = vlaneseq
    %v1449 = vshrl.u32 %v1448, 7
    %v1450 = vsub.s32 1, %v1449
    %v1451 = vrot.slane %v30, %v1450
    %v1452 = vlaneseq
    %v1453 = vshrl.u32 %v1452, 7
    %v1454 = vsub.s32 3, %v1453
    %v1455 = vrot.slane %v30, %v1454
    %v1456 = vlaneseq
    %v1457 = vshrl.u32 %v1456, 7
    %v1458 = vsub.s32 5, %v1457
    %v1459 = vrot.slane %v30, %v1458
    %v1460 = vlaneseq
    %v1461 = vshrl.u32 %v1460, 7
    %v1462 = vsub.s32 7, %v1461
    %v1463 = vrot.slane %v30, %v1462
    %v1464 = vlaneseq
    %v1465 = vshrl.u32 %v1464, 7
    %v1466 = vsub.s32 1, %v1465
    %v1467 = vrot.slane %v31, %v1466
    %v1468 = vlaneseq
    %v1469 = vshrl.u32 %v1468, 7
    %v1470 = vsub.s32 3, %v1469
    %v1471 = vrot.slane %v31, %v1470
    %v1472 = vlaneseq
    %v1473 = vshrl.u32 %v1472, 7
    %v1474 = vsub.s32 5, %v1473
    %v1475 = vrot.slane %v31, %v1474
    %v1476 = vlaneseq
    %v1477 = vshrl.u32 %v1476, 7
    %v1478 = vsub.s32 7, %v1477
    %v1479 = vrot.slane %v31, %v1478
    %v1480 = vlaneseq
    %v1481 = vshrl.u32 %v1480, 7
    %v1482 = vsub.s32 1, %v1481
    %v1483 = vrot.slane %v32, %v1482
    %v1484 = vlaneseq
    %v1485 = vshrl.u32 %v1484, 7
    %v1486 = vsub.s32 1, %v1485
    %v1487 = vrot.slane %v1451, %v1486
    %v1488 = vlaneseq
    %v1489 = vshrl.u32 %v1488, 7
    %v1490 = vsub.s32 1, %v1489
    %v1491 = vrot.slane %v1455, %v1490
    %v1492 = vlaneseq
    %v1493 = vshrl.u32 %v1492, 7
    %v1494 = vsub.s32 1, %v1493
    %v1495 = vrot.slane %v1459, %v1494
    %v1496 = vlaneseq
    %v1497 = vshrl.u32 %v1496, 7
    %v1498 = vsub.s32 1, %v1497
    %v1499 = vrot.slane %v1463, %v1498
    %v1500 = vlaneseq
    %v1501 = vshrl.u32 %v1500, 7
    %v1502 = vsub.s32 1, %v1501
    %v1503 = vrot.slane %v1467, %v1502
    %v1504 = vlaneseq
    %v1505 = vshrl.u32 %v1504, 7
    %v1506 = vsub.s32 1, %v1505
    %v1507 = vrot.slane %v1471, %v1506
    %v1508 = vlaneseq
    %v1509 = vshrl.u32 %v1508, 7
    %v1510 = vsub.s32 1, %v1509
    %v1511 = vrot.slane %v1475, %v1510
    %v1512 = vlaneseq
    %v1513 = vshrl.u32 %v1512, 7
    %v1514 = vsub.s32 1, %v1513
    %v1515 = vrot.slane %v1479, %v1514
    %v1516 = vlaneseq
    %v1517 = vshrl.u32 %v1516, 7
    %v1518 = vsub.s32 1, %v1517
    %v1519 = vrot.slane %v1483, %v1518
    %vm1520 = vcmp.eq.s32.totalorder %v34, %v1487
    %vm1521 = vcmp.eq.s32.totalorder %v34, %v1491
    %vm1522 = vcmp.eq.s32.totalorder %v34, %v1495
    %vm1523 = vcmp.eq.s32.totalorder %v34, %v1499
    %vm1524 = vcmp.eq.s32.totalorder %v34, %v1503
    %vm1525 = vcmp.eq.s32.totalorder %v34, %v1507
    %vm1526 = vcmp.eq.s32.totalorder %v34, %v1511
    %vm1527 = vcmp.eq.s32.totalorder %v34, %v1515
    %vm1528 = vcmp.eq.s32.totalorder %v34, %v1519
    %vm1529 = vcmp.eq.s32.totalorder %v35, %v1487
    %vm1530 = vcmp.eq.s32.totalorder %v35, %v1491
    %vm1531 = vcmp.eq.s32.totalorder %v35, %v1495
    %vm1532 = vcmp.eq.s32.totalorder %v35, %v1499
    %vm1533 = vcmp.eq.s32.totalorder %v35, %v1503
    %vm1534 = vcmp.eq.s32.totalorder %v35, %v1507
    %vm1535 = vcmp.eq.s32.totalorder %v35, %v1511
    %vm1536 = vcmp.eq.s32.totalorder %v35, %v1515
    %vm1537 = vcmp.eq.s32.totalorder %v35, %v1519
    %vm1538 = vcmp.eq.s32.totalorder %v36, %v1487
    %vm1539 = vcmp.eq.s32.totalorder %v36, %v1491
    %vm1540 = vcmp.eq.s32.totalorder %v36, %v1495
    %vm1541 = vcmp.eq.s32.totalorder %v36, %v1499
    %vm1542 = vcmp.eq.s32.totalorder %v36, %v1503
    %vm1543 = vcmp.eq.s32.totalorder %v36, %v1507
    %vm1544 = vcmp.eq.s32.totalorder %v36, %v1511
    %vm1545 = vcmp.eq.s32.totalorder %v36, %v1515
    %vm1546 = vcmp.eq.s32.totalorder %v36, %v1519
    %vm1547 = vcmp.eq.s32.totalorder %v37, %v1487
    %vm1548 = vcmp.eq.s32.totalorder %v37, %v1491
    %vm1549 = vcmp.eq.s32.totalorder %v37, %v1495
    %vm1550 = vcmp.eq.s32.totalorder %v37, %v1499
    %vm1551 = vcmp.eq.s32.totalorder %v37, %v1503
    %vm1552 = vcmp.eq.s32.totalorder %v37, %v1507
    %vm1553 = vcmp.eq.s32.totalorder %v37, %v1511
    %vm1554 = vcmp.eq.s32.totalorder %v37, %v1515
    %vm1555 = vcmp.eq.s32.totalorder %v37, %v1519
    %vm1556 = vcmp.eq.s32.totalorder %v38, %v1487
    %vm1557 = vcmp.eq.s32.totalorder %v38, %v1491
    %vm1558 = vcmp.eq.s32.totalorder %v38, %v1495
    %vm1559 = vcmp.eq.s32.totalorder %v38, %v1499
    %vm1560 = vcmp.eq.s32.totalorder %v38, %v1503
    %vm1561 = vcmp.eq.s32.totalorder %v38, %v1507
    %vm1562 = vcmp.eq.s32.totalorder %v38, %v1511
    %vm1563 = vcmp.eq.s32.totalorder %v38, %v1515
    %vm1564 = vcmp.eq.s32.totalorder %v38, %v1519
    %vm1565 = vcmp.eq.s32.totalorder %v39, %v1487
    %vm1566 = vcmp.eq.s32.totalorder %v39, %v1491
    %vm1567 = vcmp.eq.s32.totalorder %v39, %v1495
    %vm1568 = vcmp.eq.s32.totalorder %v39, %v1499
    %vm1569 = vcmp.eq.s32.totalorder %v39, %v1503
    %vm1570 = vcmp.eq.s32.totalorder %v39, %v1507
    %vm1571 = vcmp.eq.s32.totalorder %v39, %v1511
    %vm1572 = vcmp.eq.s32.totalorder %v39, %v1515
    %vm1573 = vcmp.eq.s32.totalorder %v39, %v1519
    %vm1574 = vcmp.eq.s32.totalorder %v40, %v1487
    %vm1575 = vcmp.eq.s32.totalorder %v40, %v1491
    %vm1576 = vcmp.eq.s32.totalorder %v40, %v1495
    %vm1577 = vcmp.eq.s32.totalorder %v40, %v1499
    %vm1578 = vcmp.eq.s32.totalorder %v40, %v1503
    %vm1579 = vcmp.eq.s32.totalorder %v40, %v1507
    %vm1580 = vcmp.eq.s32.totalorder %v40, %v1511
    %vm1581 = vcmp.eq.s32.totalorder %v40, %v1515
    %vm1582 = vcmp.eq.s32.totalorder %v40, %v1519
    %vm1583 = vcmp.eq.s32.totalorder %v41, %v1487
    %vm1584 = vcmp.eq.s32.totalorder %v41, %v1491
    %vm1585 = vcmp.eq.s32.totalorder %v41, %v1495
    %vm1586 = vcmp.eq.s32.totalorder %v41, %v1499
    %vm1587 = vcmp.eq.s32.totalorder %v41, %v1503
    %vm1588 = vcmp.eq.s32.totalorder %v41, %v1507
    %vm1589 = vcmp.eq.s32.totalorder %v41, %v1511
    %vm1590 = vcmp.eq.s32.totalorder %v41, %v1515
    %vm1591 = vcmp.eq.s32.totalorder %v41, %v1519
    %vm1592 = vcmp.eq.s32.totalorder %v42, %v1487
    %vm1593 = vcmp.eq.s32.totalorder %v42, %v1491
    %vm1594 = vcmp.eq.s32.totalorder %v42, %v1495
    %vm1595 = vcmp.eq.s32.totalorder %v42, %v1499
    %vm1596 = vcmp.eq.s32.totalorder %v42, %v1503
    %vm1597 = vcmp.eq.s32.totalorder %v42, %v1507
    %vm1598 = vcmp.eq.s32.totalorder %v42, %v1511
    %vm1599 = vcmp.eq.s32.totalorder %v42, %v1515
    %vm1600 = vcmp.eq.s32.totalorder %v42, %v1519
    %vm1601 = vcmp.eq.s32.totalorder %v43, %v1487
    %vm1602 = vcmp.eq.s32.totalorder %v43, %v1491
    %vm1603 = vcmp.eq.s32.totalorder %v43, %v1495
    %vm1604 = vcmp.eq.s32.totalorder %v43, %v1499
    %vm1605 = vcmp.eq.s32.totalorder %v43, %v1503
    %vm1606 = vcmp.eq.s32.totalorder %v43, %v1507
    %vm1607 = vcmp.eq.s32.totalorder %v43, %v1511
    %vm1608 = vcmp.eq.s32.totalorder %v43, %v1515
    %vm1609 = vcmp.eq.s32.totalorder %v43, %v1519
    %vm1610 = vcmp.eq.s32.totalorder %v44, %v1487
    %vm1611 = vcmp.eq.s32.totalorder %v44, %v1491
    %vm1612 = vcmp.eq.s32.totalorder %v44, %v1495
    %vm1613 = vcmp.eq.s32.totalorder %v44, %v1499
    %vm1614 = vcmp.eq.s32.totalorder %v44, %v1503
    %vm1615 = vcmp.eq.s32.totalorder %v44, %v1507
    %vm1616 = vcmp.eq.s32.totalorder %v44, %v1511
    %vm1617 = vcmp.eq.s32.totalorder %v44, %v1515
    %vm1618 = vcmp.eq.s32.totalorder %v44, %v1519
    %vm1619 = vcmp.eq.s32.totalorder %v45, %v1487
    %vm1620 = vcmp.eq.s32.totalorder %v45, %v1491
    %vm1621 = vcmp.eq.s32.totalorder %v45, %v1495
    %vm1622 = vcmp.eq.s32.totalorder %v45, %v1499
    %vm1623 = vcmp.eq.s32.totalorder %v45, %v1503
    %vm1624 = vcmp.eq.s32.totalorder %v45, %v1507
    %vm1625 = vcmp.eq.s32.totalorder %v45, %v1511
    %vm1626 = vcmp.eq.s32.totalorder %v45, %v1515
    %vm1627 = vcmp.eq.s32.totalorder %v45, %v1519
    %vm1628 = vcmp.eq.s32.totalorder %v46, %v1487
    %vm1629 = vcmp.eq.s32.totalorder %v46, %v1491
    %vm1630 = vcmp.eq.s32.totalorder %v46, %v1495
    %vm1631 = vcmp.eq.s32.totalorder %v46, %v1499
    %vm1632 = vcmp.eq.s32.totalorder %v46, %v1503
    %vm1633 = vcmp.eq.s32.totalorder %v46, %v1507
    %vm1634 = vcmp.eq.s32.totalorder %v46, %v1511
    %vm1635 = vcmp.eq.s32.totalorder %v46, %v1515
    %vm1636 = vcmp.eq.s32.totalorder %v46, %v1519
    %vm1637 = vcmp.eq.s32.totalorder %v47, %v1487
    %vm1638 = vcmp.eq.s32.totalorder %v47, %v1491
    %vm1639 = vcmp.eq.s32.totalorder %v47, %v1495
    %vm1640 = vcmp.eq.s32.totalorder %v47, %v1499
    %vm1641 = vcmp.eq.s32.totalorder %v47, %v1503
    %vm1642 = vcmp.eq.s32.totalorder %v47, %v1507
    %vm1643 = vcmp.eq.s32.totalorder %v47, %v1511
    %vm1644 = vcmp.eq.s32.totalorder %v47, %v1515
    %vm1645 = vcmp.eq.s32.totalorder %v47, %v1519
    %vm1646 = vcmp.eq.s32.totalorder %v48, %v1487
    %vm1647 = vcmp.eq.s32.totalorder %v48, %v1491
    %vm1648 = vcmp.eq.s32.totalorder %v48, %v1495
    %vm1649 = vcmp.eq.s32.totalorder %v48, %v1499
    %vm1650 = vcmp.eq.s32.totalorder %v48, %v1503
    %vm1651 = vcmp.eq.s32.totalorder %v48, %v1507
    %vm1652 = vcmp.eq.s32.totalorder %v48, %v1511
    %vm1653 = vcmp.eq.s32.totalorder %v48, %v1515
    %vm1654 = vcmp.eq.s32.totalorder %v48, %v1519
    %vm1655 = vcmp.eq.s32.totalorder %v49, %v1487
    %vm1656 = vcmp.eq.s32.totalorder %v49, %v1491
    %vm1657 = vcmp.eq.s32.totalorder %v49, %v1495
    %vm1658 = vcmp.eq.s32.totalorder %v49, %v1499
    %vm1659 = vcmp.eq.s32.totalorder %v49, %v1503
    %vm1660 = vcmp.eq.s32.totalorder %v49, %v1507
    %vm1661 = vcmp.eq.s32.totalorder %v49, %v1511
    %vm1662 = vcmp.eq.s32.totalorder %v49, %v1515
    %vm1663 = vcmp.eq.s32.totalorder %v49, %v1519
    %v1664 = vsel %vm1520, 1, 0
    %v1665 = vsel %vm1521, 1, 0
    %v1666 = vsel %vm1522, 1, 0
    %v1667 = vsel %vm1523, 1, 0
    %v1668 = vsel %vm1524, 1, 0
    %v1669 = vsel %vm1525, 1, 0
    %v1670 = vsel %vm1526, 1, 0
    %v1671 = vsel %vm1527, 1, 0
    %v1672 = vsel %vm1528, 1, 0
    %v1673 = vsel %vm1529, 1, 0
    %v1674 = vsel %vm1530, 1, 0
    %v1675 = vsel %vm1531, 1, 0
    %v1676 = vsel %vm1532, 1, 0
    %v1677 = vsel %vm1533, 1, 0
    %v1678 = vsel %vm1534, 1, 0
    %v1679 = vsel %vm1535, 1, 0
    %v1680 = vsel %vm1536, 1, 0
    %v1681 = vsel %vm1537, 1, 0
    %v1682 = vsel %vm1538, 1, 0
    %v1683 = vsel %vm1539, 1, 0
    %v1684 = vsel %vm1540, 1, 0
    %v1685 = vsel %vm1541, 1, 0
    %v1686 = vsel %vm1542, 1, 0
    %v1687 = vsel %vm1543, 1, 0
    %v1688 = vsel %vm1544, 1, 0
    %v1689 = vsel %vm1545, 1, 0
    %v1690 = vsel %vm1546, 1, 0
    %v1691 = vsel %vm1547, 1, 0
    %v1692 = vsel %vm1548, 1, 0
    %v1693 = vsel %vm1549, 1, 0
    %v1694 = vsel %vm1550, 1, 0
    %v1695 = vsel %vm1551, 1, 0
    %v1696 = vsel %vm1552, 1, 0
    %v1697 = vsel %vm1553, 1, 0
    %v1698 = vsel %vm1554, 1, 0
    %v1699 = vsel %vm1555, 1, 0
    %v1700 = vsel %vm1556, 1, 0
    %v1701 = vsel %vm1557, 1, 0
    %v1702 = vsel %vm1558, 1, 0
    %v1703 = vsel %vm1559, 1, 0
    %v1704 = vsel %vm1560, 1, 0
    %v1705 = vsel %vm1561, 1, 0
    %v1706 = vsel %vm1562, 1, 0
    %v1707 = vsel %vm1563, 1, 0
    %v1708 = vsel %vm1564, 1, 0
    %v1709 = vsel %vm1565, 1, 0
    %v1710 = vsel %vm1566, 1, 0
    %v1711 = vsel %vm1567, 1, 0
    %v1712 = vsel %vm1568, 1, 0
    %v1713 = vsel %vm1569, 1, 0
    %v1714 = vsel %vm1570, 1, 0
    %v1715 = vsel %vm1571, 1, 0
    %v1716 = vsel %vm1572, 1, 0
    %v1717 = vsel %vm1573, 1, 0
    %v1718 = vsel %vm1574, 1, 0
    %v1719 = vsel %vm1575, 1, 0
    %v1720 = vsel %vm1576, 1, 0
    %v1721 = vsel %vm1577, 1, 0
    %v1722 = vsel %vm1578, 1, 0
    %v1723 = vsel %vm1579, 1, 0
    %v1724 = vsel %vm1580, 1, 0
    %v1725 = vsel %vm1581, 1, 0
    %v1726 = vsel %vm1582, 1, 0
    %v1727 = vsel %vm1583, 1, 0
    %v1728 = vsel %vm1584, 1, 0
    %v1729 = vsel %vm1585, 1, 0
    %v1730 = vsel %vm1586, 1, 0
    %v1731 = vsel %vm1587, 1, 0
    %v1732 = vsel %vm1588, 1, 0
    %v1733 = vsel %vm1589, 1, 0
    %v1734 = vsel %vm1590, 1, 0
    %v1735 = vsel %vm1591, 1, 0
    %v1736 = vsel %vm1592, 1, 0
    %v1737 = vsel %vm1593, 1, 0
    %v1738 = vsel %vm1594, 1, 0
    %v1739 = vsel %vm1595, 1, 0
    %v1740 = vsel %vm1596, 1, 0
    %v1741 = vsel %vm1597, 1, 0
    %v1742 = vsel %vm1598, 1, 0
    %v1743 = vsel %vm1599, 1, 0
    %v1744 = vsel %vm1600, 1, 0
    %v1745 = vsel %vm1601, 1, 0
    %v1746 = vsel %vm1602, 1, 0
    %v1747 = vsel %vm1603, 1, 0
    %v1748 = vsel %vm1604, 1, 0
    %v1749 = vsel %vm1605, 1, 0
    %v1750 = vsel %vm1606, 1, 0
    %v1751 = vsel %vm1607, 1, 0
    %v1752 = vsel %vm1608, 1, 0
    %v1753 = vsel %vm1609, 1, 0
    %v1754 = vsel %vm1610, 1, 0
    %v1755 = vsel %vm1611, 1, 0
    %v1756 = vsel %vm1612, 1, 0
    %v1757 = vsel %vm1613, 1, 0
    %v1758 = vsel %vm1614, 1, 0
    %v1759 = vsel %vm1615, 1, 0
    %v1760 = vsel %vm1616, 1, 0
    %v1761 = vsel %vm1617, 1, 0
    %v1762 = vsel %vm1618, 1, 0
    %v1763 = vsel %vm1619, 1, 0
    %v1764 = vsel %vm1620, 1, 0
    %v1765 = vsel %vm1621, 1, 0
    %v1766 = vsel %vm1622, 1, 0
    %v1767 = vsel %vm1623, 1, 0
    %v1768 = vsel %vm1624, 1, 0
    %v1769 = vsel %vm1625, 1, 0
    %v1770 = vsel %vm1626, 1, 0
    %v1771 = vsel %vm1627, 1, 0
    %v1772 = vsel %vm1628, 1, 0
    %v1773 = vsel %vm1629, 1, 0
    %v1774 = vsel %vm1630, 1, 0
    %v1775 = vsel %vm1631, 1, 0
    %v1776 = vsel %vm1632, 1, 0
    %v1777 = vsel %vm1633, 1, 0
    %v1778 = vsel %vm1634, 1, 0
    %v1779 = vsel %vm1635, 1, 0
    %v1780 = vsel %vm1636, 1, 0
    %v1781 = vsel %vm1637, 1, 0
    %v1782 = vsel %vm1638, 1, 0
    %v1783 = vsel %vm1639, 1, 0
    %v1784 = vsel %vm1640, 1, 0
    %v1785 = vsel %vm1641, 1, 0
    %v1786 = vsel %vm1642, 1, 0
    %v1787 = vsel %vm1643, 1, 0
    %v1788 = vsel %vm1644, 1, 0
    %v1789 = vsel %vm1645, 1, 0
    %v1790 = vsel %vm1646, 1, 0
    %v1791 = vsel %vm1647, 1, 0
    %v1792 = vsel %vm1648, 1, 0
    %v1793 = vsel %vm1649, 1, 0
    %v1794 = vsel %vm1650, 1, 0
    %v1795 = vsel %vm1651, 1, 0
    %v1796 = vsel %vm1652, 1, 0
    %v1797 = vsel %vm1653, 1, 0
    %v1798 = vsel %vm1654, 1, 0
    %v1799 = vsel %vm1655, 1, 0
    %v1800 = vsel %vm1656, 1, 0
    %v1801 = vsel %vm1657, 1, 0
    %v1802 = vsel %vm1658, 1, 0
    %v1803 = vsel %vm1659, 1, 0
    %v1804 = vsel %vm1660, 1, 0
    %v1805 = vsel %vm1661, 1, 0
    %v1806 = vsel %vm1662, 1, 0
    %v1807 = vsel %vm1663, 1, 0
    %v1808 = vcvt.s32.f32 %v1664
    %v1809 = vcvt.s32.f32 %v1665
    %v1810 = vcvt.s32.f32 %v1666
    %v1811 = vcvt.s32.f32 %v1667
    %v1812 = vcvt.s32.f32 %v1668
    %v1813 = vcvt.s32.f32 %v1669
    %v1814 = vcvt.s32.f32 %v1670
    %v1815 = vcvt.s32.f32 %v1671
    %v1816 = vcvt.s32.f32 %v1672
    %v1817 = vcvt.s32.f32 %v1673
    %v1818 = vcvt.s32.f32 %v1674
    %v1819 = vcvt.s32.f32 %v1675
    %v1820 = vcvt.s32.f32 %v1676
    %v1821 = vcvt.s32.f32 %v1677
    %v1822 = vcvt.s32.f32 %v1678
    %v1823 = vcvt.s32.f32 %v1679
    %v1824 = vcvt.s32.f32 %v1680
    %v1825 = vcvt.s32.f32 %v1681
    %v1826 = vcvt.s32.f32 %v1682
    %v1827 = vcvt.s32.f32 %v1683
    %v1828 = vcvt.s32.f32 %v1684
    %v1829 = vcvt.s32.f32 %v1685
    %v1830 = vcvt.s32.f32 %v1686
    %v1831 = vcvt.s32.f32 %v1687
    %v1832 = vcvt.s32.f32 %v1688
    %v1833 = vcvt.s32.f32 %v1689
    %v1834 = vcvt.s32.f32 %v1690
    %v1835 = vcvt.s32.f32 %v1691
    %v1836 = vcvt.s32.f32 %v1692
    %v1837 = vcvt.s32.f32 %v1693
    %v1838 = vcvt.s32.f32 %v1694
    %v1839 = vcvt.s32.f32 %v1695
    %v1840 = vcvt.s32.f32 %v1696
    %v1841 = vcvt.s32.f32 %v1697
    %v1842 = vcvt.s32.f32 %v1698
    %v1843 = vcvt.s32.f32 %v1699
    %v1844 = vcvt.s32.f32 %v1700
    %v1845 = vcvt.s32.f32 %v1701
    %v1846 = vcvt.s32.f32 %v1702
    %v1847 = vcvt.s32.f32 %v1703
    %v1848 = vcvt.s32.f32 %v1704
    %v1849 = vcvt.s32.f32 %v1705
    %v1850 = vcvt.s32.f32 %v1706
    %v1851 = vcvt.s32.f32 %v1707
    %v1852 = vcvt.s32.f32 %v1708
    %v1853 = vcvt.s32.f32 %v1709
    %v1854 = vcvt.s32.f32 %v1710
    %v1855 = vcvt.s32.f32 %v1711
    %v1856 = vcvt.s32.f32 %v1712
    %v1857 = vcvt.s32.f32 %v1713
    %v1858 = vcvt.s32.f32 %v1714
    %v1859 = vcvt.s32.f32 %v1715
    %v1860 = vcvt.s32.f32 %v1716
    %v1861 = vcvt.s32.f32 %v1717
    %v1862 = vcvt.s32.f32 %v1718
    %v1863 = vcvt.s32.f32 %v1719
    %v1864 = vcvt.s32.f32 %v1720
    %v1865 = vcvt.s32.f32 %v1721
    %v1866 = vcvt.s32.f32 %v1722
    %v1867 = vcvt.s32.f32 %v1723
    %v1868 = vcvt.s32.f32 %v1724
    %v1869 = vcvt.s32.f32 %v1725
    %v1870 = vcvt.s32.f32 %v1726
    %v1871 = vcvt.s32.f32 %v1727
    %v1872 = vcvt.s32.f32 %v1728
    %v1873 = vcvt.s32.f32 %v1729
    %v1874 = vcvt.s32.f32 %v1730
    %v1875 = vcvt.s32.f32 %v1731
    %v1876 = vcvt.s32.f32 %v1732
    %v1877 = vcvt.s32.f32 %v1733
    %v1878 = vcvt.s32.f32 %v1734
    %v1879 = vcvt.s32.f32 %v1735
    %v1880 = vcvt.s32.f32 %v1736
    %v1881 = vcvt.s32.f32 %v1737
    %v1882 = vcvt.s32.f32 %v1738
    %v1883 = vcvt.s32.f32 %v1739
    %v1884 = vcvt.s32.f32 %v1740
    %v1885 = vcvt.s32.f32 %v1741
    %v1886 = vcvt.s32.f32 %v1742
    %v1887 = vcvt.s32.f32 %v1743
    %v1888 = vcvt.s32.f32 %v1744
    %v1889 = vcvt.s32.f32 %v1745
    %v1890 = vcvt.s32.f32 %v1746
    %v1891 = vcvt.s32.f32 %v1747
    %v1892 = vcvt.s32.f32 %v1748
    %v1893 = vcvt.s32.f32 %v1749
    %v1894 = vcvt.s32.f32 %v1750
    %v1895 = vcvt.s32.f32 %v1751
    %v1896 = vcvt.s32.f32 %v1752
    %v1897 = vcvt.s32.f32 %v1753
    %v1898 = vcvt.s32.f32 %v1754
    %v1899 = vcvt.s32.f32 %v1755
    %v1900 = vcvt.s32.f32 %v1756
    %v1901 = vcvt.s32.f32 %v1757
    %v1902 = vcvt.s32.f32 %v1758
    %v1903 = vcvt.s32.f32 %v1759
    %v1904 = vcvt.s32.f32 %v1760
    %v1905 = vcvt.s32.f32 %v1761
    %v1906 = vcvt.s32.f32 %v1762
    %v1907 = vcvt.s32.f32 %v1763
    %v1908 = vcvt.s32.f32 %v1764
    %v1909 = vcvt.s32.f32 %v1765
    %v1910 = vcvt.s32.f32 %v1766
    %v1911 = vcvt.s32.f32 %v1767
    %v1912 = vcvt.s32.f32 %v1768
    %v1913 = vcvt.s32.f32 %v1769
    %v1914 = vcvt.s32.f32 %v1770
    %v1915 = vcvt.s32.f32 %v1771
    %v1916 = vcvt.s32.f32 %v1772
    %v1917 = vcvt.s32.f32 %v1773
    %v1918 = vcvt.s32.f32 %v1774
    %v1919 = vcvt.s32.f32 %v1775
    %v1920 = vcvt.s32.f32 %v1776
    %v1921 = vcvt.s32.f32 %v1777
    %v1922 = vcvt.s32.f32 %v1778
    %v1923 = vcvt.s32.f32 %v1779
    %v1924 = vcvt.s32.f32 %v1780
    %v1925 = vcvt.s32.f32 %v1781
    %v1926 = vcvt.s32.f32 %v1782
    %v1927 = vcvt.s32.f32 %v1783
    %v1928 = vcvt.s32.f32 %v1784
    %v1929 = vcvt.s32.f32 %v1785
    %v1930 = vcvt.s32.f32 %v1786
    %v1931 = vcvt.s32.f32 %v1787
    %v1932 = vcvt.s32.f32 %v1788
    %v1933 = vcvt.s32.f32 %v1789
    %v1934 = vcvt.s32.f32 %v1790
    %v1935 = vcvt.s32.f32 %v1791
    %v1936 = vcvt.s32.f32 %v1792
    %v1937 = vcvt.s32.f32 %v1793
    %v1938 = vcvt.s32.f32 %v1794
    %v1939 = vcvt.s32.f32 %v1795
    %v1940 = vcvt.s32.f32 %v1796
    %v1941 = vcvt.s32.f32 %v1797
    %v1942 = vcvt.s32.f32 %v1798
    %v1943 = vcvt.s32.f32 %v1799
    %v1944 = vcvt.s32.f32 %v1800
    %v1945 = vcvt.s32.f32 %v1801
    %v1946 = vcvt.s32.f32 %v1802
    %v1947 = vcvt.s32.f32 %v1803
    %v1948 = vcvt.s32.f32 %v1804
    %v1949 = vcvt.s32.f32 %v1805
    %v1950 = vcvt.s32.f32 %v1806
    %v1951 = vcvt.s32.f32 %v1807
    %1952 = vmatprep.subr.mxu0 %v1809
    %1953 = vmatpush1.msra.mxu0 %v1808
    %1954 = vmatprep.subr.mxu0 %v1818
    %1955 = vmatpush1.msra.mxu0 %v1817
    %1956 = vmatprep.subr.mxu0 %v1827
    %1957 = vmatpush1.msra.mxu0 %v1826
    %1958 = vmatprep.subr.mxu0 %v1836
    %1959 = vmatpush1.msra.mxu0 %v1835
    %1960 = vmatprep.subr.mxu0 %v1845
    %1961 = vmatpush1.msra.mxu0 %v1844
    %1962 = vmatprep.subr.mxu0 %v1854
    %1963 = vmatpush1.msra.mxu0 %v1853
    %1964 = vmatprep.subr.mxu0 %v1863
    %1965 = vmatpush1.msra.mxu0 %v1862
    %1966 = vmatprep.subr.mxu0 %v1872
    %1967 = vmatpush1.msra.mxu0 %v1871
    %1968 = vmatprep.subr.mxu0 %v1881
    %1969 = vmatpush1.msra.mxu0 %v1880
    %1970 = vmatprep.subr.mxu0 %v1890
    %1971 = vmatpush1.msra.mxu0 %v1889
    %1972 = vmatprep.subr.mxu0 %v1899
    %1973 = vmatpush1.msra.mxu0 %v1898
    %1974 = vmatprep.subr.mxu0 %v1908
    %1975 = vmatpush1.msra.mxu0 %v1907
    %1976 = vmatprep.subr.mxu0 %v1917
    %1977 = vmatpush1.msra.mxu0 %v1916
    %1978 = vmatprep.subr.mxu0 %v1926
    %1979 = vmatpush1.msra.mxu0 %v1925
    %1980 = vmatprep.subr.mxu0 %v1935
    %1981 = vmatpush1.msra.mxu0 %v1934
    %1982 = vmatprep.subr.mxu0 %v1944
    %1983 = vmatpush1.msra.mxu0 %v1943
    %1984 = vmatprep.subr.mxu0 0.0
    %1985 = vmatpush1.msra.mxu0 0.0
    %1986 = vmatprep.subr.mxu0 0.0
    %1987 = vmatpush1.msra.mxu0 0.0
    %1988 = vmatprep.subr.mxu0 0.0
    %1989 = vmatpush1.msra.mxu0 0.0
    %1990 = vmatprep.subr.mxu0 0.0
    %1991 = vmatpush1.msra.mxu0 0.0
    %1992 = vmatprep.subr.mxu0 0.0
    %1993 = vmatpush1.msra.mxu0 0.0
    %1994 = vmatprep.subr.mxu0 0.0
    %1995 = vmatpush1.msra.mxu0 0.0
    %1996 = vmatprep.subr.mxu0 0.0
    %1997 = vmatpush1.msra.mxu0 0.0
    %1998 = vmatprep.subr.mxu0 0.0
    %1999 = vmatpush1.msra.mxu0 0.0
    %2000 = vmatprep.subr.mxu0 0.0
    %2001 = vmatpush1.msra.mxu0 0.0
    %2002 = vmatprep.subr.mxu0 0.0
    %2003 = vmatpush1.msra.mxu0 0.0
    %2004 = vmatprep.subr.mxu0 0.0
    %2005 = vmatpush1.msra.mxu0 0.0
    %2006 = vmatprep.subr.mxu0 0.0
    %2007 = vmatpush1.msra.mxu0 0.0
    %2008 = vmatprep.subr.mxu0 0.0
    %2009 = vmatpush1.msra.mxu0 0.0
    %2010 = vmatprep.subr.mxu0 0.0
    %2011 = vmatpush1.msra.mxu0 0.0
    %2012 = vmatprep.subr.mxu0 0.0
    %2013 = vmatpush1.msra.mxu0 0.0
    %2014 = vmatprep.subr.mxu0 0.0
    %2015 = vmatpush1.msra.mxu0 0.0
    %2016 = vmatprep.mubr.f32.mxu0 0.0
    %2017 = vmatmul.mubr.f32.gmra.mrb[0].mxu0 %v1410
    %v2018 = vpop.f32.mrb[0].mxu0
    %v2019 = vpop.f32.mrb[0].mxu0
    %2020 = vmatprep.mubr.f32.mxu0 0.0
    %2021 = vmatmul.mubr.f32.gmra.mrb[0].mxu0 %v1415
    %v2022 = vpop.f32.mrb[0].mxu0
    %v2023 = vpop.f32.mrb[0].mxu0
    %2024 = vmatprep.mubr.f32.mxu0 0.0
    %2025 = vmatmul.mubr.f32.gmra.mrb[0].mxu0 %v1420
    %v2026 = vpop.f32.mrb[0].mxu0
    %v2027 = vpop.f32.mrb[0].mxu0
    %2028 = vmatprep.mubr.f32.mxu0 0.0
    %2029 = vmatmul.mubr.f32.gmra.mrb[0].mxu0 %v1425
    %v2030 = vpop.f32.mrb[0].mxu0
    %v2031 = vpop.f32.mrb[0].mxu0
    %2032 = vmatprep.mubr.f32.mxu0 0.0
    %2033 = vmatmul.mubr.f32.gmra.mrb[0].mxu0 %v1430
    %v2034 = vpop.f32.mrb[0].mxu0
    %v2035 = vadd.f32 0.0, %v2034
    %v2036 = vpop.f32.mrb[0].mxu0
    %v2037 = vadd.f32 0.0, %v2036
    %2038 = vmatprep.mubr.f32.mxu0 0.0
    %2039 = vmatmul.mubr.f32.gmra.mrb[0].mxu0 %v1435
    %v2040 = vpop.f32.mrb[0].mxu0
    %v2041 = vadd.f32 0.0, %v2040
    %v2042 = vpop.f32.mrb[0].mxu0
    %v2043 = vadd.f32 0.0, %v2042
    %2044 = vmatprep.mubr.f32.mxu0 0.0
    %2045 = vmatmul.mubr.f32.gmra.mrb[0].mxu0 %v1440
    %v2046 = vpop.f32.mrb[0].mxu0
    %v2047 = vadd.f32 0.0, %v2046
    %v2048 = vpop.f32.mrb[0].mxu0
    %v2049 = vadd.f32 0.0, %v2048
    %2050 = vmatprep.mubr.f32.mxu0 0.0
    %2051 = vmatmul.mubr.f32.gmra.mrb[0].mxu0 %v1445
    %v2052 = vpop.f32.mrb[0].mxu0
    %v2053 = vadd.f32 0.0, %v2052
    %v2054 = vpop.f32.mrb[0].mxu0
    %v2055 = vadd.f32 0.0, %v2054
    %2056 = vdwg.mxu0
    %2057 = vmatprep.subr.mxu0 %v1811
    %2058 = vmatpush1.msra.mxu0 %v1810
    %2059 = vmatprep.subr.mxu0 %v1820
    %2060 = vmatpush1.msra.mxu0 %v1819
    %2061 = vmatprep.subr.mxu0 %v1829
    %2062 = vmatpush1.msra.mxu0 %v1828
    %2063 = vmatprep.subr.mxu0 %v1838
    %2064 = vmatpush1.msra.mxu0 %v1837
    %2065 = vmatprep.subr.mxu0 %v1847
    %2066 = vmatpush1.msra.mxu0 %v1846
    %2067 = vmatprep.subr.mxu0 %v1856
    %2068 = vmatpush1.msra.mxu0 %v1855
    %2069 = vmatprep.subr.mxu0 %v1865
    %2070 = vmatpush1.msra.mxu0 %v1864
    %2071 = vmatprep.subr.mxu0 %v1874
    %2072 = vmatpush1.msra.mxu0 %v1873
    %2073 = vmatprep.subr.mxu0 %v1883
    %2074 = vmatpush1.msra.mxu0 %v1882
    %2075 = vmatprep.subr.mxu0 %v1892
    %2076 = vmatpush1.msra.mxu0 %v1891
    %2077 = vmatprep.subr.mxu0 %v1901
    %2078 = vmatpush1.msra.mxu0 %v1900
    %2079 = vmatprep.subr.mxu0 %v1910
    %2080 = vmatpush1.msra.mxu0 %v1909
    %2081 = vmatprep.subr.mxu0 %v1919
    %2082 = vmatpush1.msra.mxu0 %v1918
    %2083 = vmatprep.subr.mxu0 %v1928
    %2084 = vmatpush1.msra.mxu0 %v1927
    %2085 = vmatprep.subr.mxu0 %v1937
    %2086 = vmatpush1.msra.mxu0 %v1936
    %2087 = vmatprep.subr.mxu0 %v1946
    %2088 = vmatpush1.msra.mxu0 %v1945
    %2089 = vmatprep.subr.mxu0 0.0
    %2090 = vmatpush1.msra.mxu0 0.0
    %2091 = vmatprep.subr.mxu0 0.0
    %2092 = vmatpush1.msra.mxu0 0.0
    %2093 = vmatprep.subr.mxu0 0.0
    %2094 = vmatpush1.msra.mxu0 0.0
    %2095 = vmatprep.subr.mxu0 0.0
    %2096 = vmatpush1.msra.mxu0 0.0
    %2097 = vmatprep.subr.mxu0 0.0
    %2098 = vmatpush1.msra.mxu0 0.0
    %2099 = vmatprep.subr.mxu0 0.0
    %2100 = vmatpush1.msra.mxu0 0.0
    %2101 = vmatprep.subr.mxu0 0.0
    %2102 = vmatpush1.msra.mxu0 0.0
    %2103 = vmatprep.subr.mxu0 0.0
    %2104 = vmatpush1.msra.mxu0 0.0
    %2105 = vmatprep.subr.mxu0 0.0
    %2106 = vmatpush1.msra.mxu0 0.0
    %2107 = vmatprep.subr.mxu0 0.0
    %2108 = vmatpush1.msra.mxu0 0.0
    %2109 = vmatprep.subr.mxu0 0.0
    %2110 = vmatpush1.msra.mxu0 0.0
    %2111 = vmatprep.subr.mxu0 0.0
    %2112 = vmatpush1.msra.mxu0 0.0
    %2113 = vmatprep.subr.mxu0 0.0
    %2114 = vmatpush1.msra.mxu0 0.0
    %2115 = vmatprep.subr.mxu0 0.0
    %2116 = vmatpush1.msra.mxu0 0.0
    %2117 = vmatprep.subr.mxu0 0.0
    %2118 = vmatpush1.msra.mxu0 0.0
    %2119 = vmatprep.subr.mxu0 0.0
    %2120 = vmatpush1.msra.mxu0 0.0
    %2121 = vmatprep.mubr.f32.mxu0 0.0
    %2122 = vmatmul.mubr.f32.gmra.mrb[0].mxu0 %v1410
    %v2123 = vpop.f32.mrb[0].mxu0
    %v2124 = vpop.f32.mrb[0].mxu0
    %2125 = vmatprep.mubr.f32.mxu0 0.0
    %2126 = vmatmul.mubr.f32.gmra.mrb[0].mxu0 %v1415
    %v2127 = vpop.f32.mrb[0].mxu0
    %v2128 = vpop.f32.mrb[0].mxu0
    %2129 = vmatprep.mubr.f32.mxu0 0.0
    %2130 = vmatmul.mubr.f32.gmra.mrb[0].mxu0 %v1420
    %v2131 = vpop.f32.mrb[0].mxu0
    %v2132 = vpop.f32.mrb[0].mxu0
    %2133 = vmatprep.mubr.f32.mxu0 0.0
    %2134 = vmatmul.mubr.f32.gmra.mrb[0].mxu0 %v1425
    %v2135 = vpop.f32.mrb[0].mxu0
    %v2136 = vpop.f32.mrb[0].mxu0
    %2137 = vmatprep.mubr.f32.mxu0 0.0
    %2138 = vmatmul.mubr.f32.gmra.mrb[0].mxu0 %v1430
    %v2139 = vpop.f32.mrb[0].mxu0
    %v2140 = vadd.f32 0.0, %v2139
    %v2141 = vpop.f32.mrb[0].mxu0
    %v2142 = vadd.f32 0.0, %v2141
    %2143 = vmatprep.mubr.f32.mxu0 0.0
    %2144 = vmatmul.mubr.f32.gmra.mrb[0].mxu0 %v1435
    %v2145 = vpop.f32.mrb[0].mxu0
    %v2146 = vadd.f32 0.0, %v2145
    %v2147 = vpop.f32.mrb[0].mxu0
    %v2148 = vadd.f32 0.0, %v2147
    %2149 = vmatprep.mubr.f32.mxu0 0.0
    %2150 = vmatmul.mubr.f32.gmra.mrb[0].mxu0 %v1440
    %v2151 = vpop.f32.mrb[0].mxu0
    %v2152 = vadd.f32 0.0, %v2151
    %v2153 = vpop.f32.mrb[0].mxu0
    %v2154 = vadd.f32 0.0, %v2153
    %2155 = vmatprep.mubr.f32.mxu0 0.0
    %2156 = vmatmul.mubr.f32.gmra.mrb[0].mxu0 %v1445
    %v2157 = vpop.f32.mrb[0].mxu0
    %v2158 = vadd.f32 0.0, %v2157
    %v2159 = vpop.f32.mrb[0].mxu0
    %v2160 = vadd.f32 0.0, %v2159
    %2161 = vdwg.mxu0
    %2162 = vmatprep.subr.mxu0 %v1813
    %2163 = vmatpush1.msra.mxu0 %v1812
    %2164 = vmatprep.subr.mxu0 %v1822
    %2165 = vmatpush1.msra.mxu0 %v1821
    %2166 = vmatprep.subr.mxu0 %v1831
    %2167 = vmatpush1.msra.mxu0 %v1830
    %2168 = vmatprep.subr.mxu0 %v1840
    %2169 = vmatpush1.msra.mxu0 %v1839
    %2170 = vmatprep.subr.mxu0 %v1849
    %2171 = vmatpush1.msra.mxu0 %v1848
    %2172 = vmatprep.subr.mxu0 %v1858
    %2173 = vmatpush1.msra.mxu0 %v1857
    %2174 = vmatprep.subr.mxu0 %v1867
    %2175 = vmatpush1.msra.mxu0 %v1866
    %2176 = vmatprep.subr.mxu0 %v1876
    %2177 = vmatpush1.msra.mxu0 %v1875
    %2178 = vmatprep.subr.mxu0 %v1885
    %2179 = vmatpush1.msra.mxu0 %v1884
    %2180 = vmatprep.subr.mxu0 %v1894
    %2181 = vmatpush1.msra.mxu0 %v1893
    %2182 = vmatprep.subr.mxu0 %v1903
    %2183 = vmatpush1.msra.mxu0 %v1902
    %2184 = vmatprep.subr.mxu0 %v1912
    %2185 = vmatpush1.msra.mxu0 %v1911
    %2186 = vmatprep.subr.mxu0 %v1921
    %2187 = vmatpush1.msra.mxu0 %v1920
    %2188 = vmatprep.subr.mxu0 %v1930
    %2189 = vmatpush1.msra.mxu0 %v1929
    %2190 = vmatprep.subr.mxu0 %v1939
    %2191 = vmatpush1.msra.mxu0 %v1938
    %2192 = vmatprep.subr.mxu0 %v1948
    %2193 = vmatpush1.msra.mxu0 %v1947
    %2194 = vmatprep.subr.mxu0 0.0
    %2195 = vmatpush1.msra.mxu0 0.0
    %2196 = vmatprep.subr.mxu0 0.0
    %2197 = vmatpush1.msra.mxu0 0.0
    %2198 = vmatprep.subr.mxu0 0.0
    %2199 = vmatpush1.msra.mxu0 0.0
    %2200 = vmatprep.subr.mxu0 0.0
    %2201 = vmatpush1.msra.mxu0 0.0
    %2202 = vmatprep.subr.mxu0 0.0
    %2203 = vmatpush1.msra.mxu0 0.0
    %2204 = vmatprep.subr.mxu0 0.0
    %2205 = vmatpush1.msra.mxu0 0.0
    %2206 = vmatprep.subr.mxu0 0.0
    %2207 = vmatpush1.msra.mxu0 0.0
    %2208 = vmatprep.subr.mxu0 0.0
    %2209 = vmatpush1.msra.mxu0 0.0
    %2210 = vmatprep.subr.mxu0 0.0
    %2211 = vmatpush1.msra.mxu0 0.0
    %2212 = vmatprep.subr.mxu0 0.0
    %2213 = vmatpush1.msra.mxu0 0.0
    %2214 = vmatprep.subr.mxu0 0.0
    %2215 = vmatpush1.msra.mxu0 0.0
    %2216 = vmatprep.subr.mxu0 0.0
    %2217 = vmatpush1.msra.mxu0 0.0
    %2218 = vmatprep.subr.mxu0 0.0
    %2219 = vmatpush1.msra.mxu0 0.0
    %2220 = vmatprep.subr.mxu0 0.0
    %2221 = vmatpush1.msra.mxu0 0.0
    %2222 = vmatprep.subr.mxu0 0.0
    %2223 = vmatpush1.msra.mxu0 0.0
    %2224 = vmatprep.subr.mxu0 0.0
    %2225 = vmatpush1.msra.mxu0 0.0
    %2226 = vmatprep.mubr.f32.mxu0 0.0
    %2227 = vmatmul.mubr.f32.gmra.mrb[0].mxu0 %v1410
    %v2228 = vpop.f32.mrb[0].mxu0
    %v2229 = vpop.f32.mrb[0].mxu0
    %2230 = vmatprep.mubr.f32.mxu0 0.0
    %2231 = vmatmul.mubr.f32.gmra.mrb[0].mxu0 %v1415
    %v2232 = vpop.f32.mrb[0].mxu0
    %v2233 = vpop.f32.mrb[0].mxu0
    %2234 = vmatprep.mubr.f32.mxu0 0.0
    %2235 = vmatmul.mubr.f32.gmra.mrb[0].mxu0 %v1420
    %v2236 = vpop.f32.mrb[0].mxu0
    %v2237 = vpop.f32.mrb[0].mxu0
    %2238 = vmatprep.mubr.f32.mxu0 0.0
    %2239 = vmatmul.mubr.f32.gmra.mrb[0].mxu0 %v1425
    %v2240 = vpop.f32.mrb[0].mxu0
    %v2241 = vpop.f32.mrb[0].mxu0
    %2242 = vmatprep.mubr.f32.mxu0 0.0
    %2243 = vmatmul.mubr.f32.gmra.mrb[0].mxu0 %v1430
    %v2244 = vpop.f32.mrb[0].mxu0
    %v2245 = vadd.f32 0.0, %v2244
    %v2246 = vpop.f32.mrb[0].mxu0
    %v2247 = vadd.f32 0.0, %v2246
    %2248 = vmatprep.mubr.f32.mxu0 0.0
    %2249 = vmatmul.mubr.f32.gmra.mrb[0].mxu0 %v1435
    %v2250 = vpop.f32.mrb[0].mxu0
    %v2251 = vadd.f32 0.0, %v2250
    %v2252 = vpop.f32.mrb[0].mxu0
    %v2253 = vadd.f32 0.0, %v2252
    %2254 = vmatprep.mubr.f32.mxu0 0.0
    %2255 = vmatmul.mubr.f32.gmra.mrb[0].mxu0 %v1440
    %v2256 = vpop.f32.mrb[0].mxu0
    %v2257 = vadd.f32 0.0, %v2256
    %v2258 = vpop.f32.mrb[0].mxu0
    %v2259 = vadd.f32 0.0, %v2258
    %2260 = vmatprep.mubr.f32.mxu0 0.0
    %2261 = vmatmul.mubr.f32.gmra.mrb[0].mxu0 %v1445
    %v2262 = vpop.f32.mrb[0].mxu0
    %v2263 = vadd.f32 0.0, %v2262
    %v2264 = vpop.f32.mrb[0].mxu0
    %v2265 = vadd.f32 0.0, %v2264
    %2266 = vdwg.mxu0
    %2267 = vmatprep.subr.mxu0 %v1815
    %2268 = vmatpush1.msra.mxu0 %v1814
    %2269 = vmatprep.subr.mxu0 %v1824
    %2270 = vmatpush1.msra.mxu0 %v1823
    %2271 = vmatprep.subr.mxu0 %v1833
    %2272 = vmatpush1.msra.mxu0 %v1832
    %2273 = vmatprep.subr.mxu0 %v1842
    %2274 = vmatpush1.msra.mxu0 %v1841
    %2275 = vmatprep.subr.mxu0 %v1851
    %2276 = vmatpush1.msra.mxu0 %v1850
    %2277 = vmatprep.subr.mxu0 %v1860
    %2278 = vmatpush1.msra.mxu0 %v1859
    %2279 = vmatprep.subr.mxu0 %v1869
    %2280 = vmatpush1.msra.mxu0 %v1868
    %2281 = vmatprep.subr.mxu0 %v1878
    %2282 = vmatpush1.msra.mxu0 %v1877
    %2283 = vmatprep.subr.mxu0 %v1887
    %2284 = vmatpush1.msra.mxu0 %v1886
    %2285 = vmatprep.subr.mxu0 %v1896
    %2286 = vmatpush1.msra.mxu0 %v1895
    %2287 = vmatprep.subr.mxu0 %v1905
    %2288 = vmatpush1.msra.mxu0 %v1904
    %2289 = vmatprep.subr.mxu0 %v1914
    %2290 = vmatpush1.msra.mxu0 %v1913
    %2291 = vmatprep.subr.mxu0 %v1923
    %2292 = vmatpush1.msra.mxu0 %v1922
    %2293 = vmatprep.subr.mxu0 %v1932
    %2294 = vmatpush1.msra.mxu0 %v1931
    %2295 = vmatprep.subr.mxu0 %v1941
    %2296 = vmatpush1.msra.mxu0 %v1940
    %2297 = vmatprep.subr.mxu0 %v1950
    %2298 = vmatpush1.msra.mxu0 %v1949
    %2299 = vmatprep.subr.mxu0 0.0
    %2300 = vmatpush1.msra.mxu0 0.0
    %2301 = vmatprep.subr.mxu0 0.0
    %2302 = vmatpush1.msra.mxu0 0.0
    %2303 = vmatprep.subr.mxu0 0.0
    %2304 = vmatpush1.msra.mxu0 0.0
    %2305 = vmatprep.subr.mxu0 0.0
    %2306 = vmatpush1.msra.mxu0 0.0
    %2307 = vmatprep.subr.mxu0 0.0
    %2308 = vmatpush1.msra.mxu0 0.0
    %2309 = vmatprep.subr.mxu0 0.0
    %2310 = vmatpush1.msra.mxu0 0.0
    %2311 = vmatprep.subr.mxu0 0.0
    %2312 = vmatpush1.msra.mxu0 0.0
    %2313 = vmatprep.subr.mxu0 0.0
    %2314 = vmatpush1.msra.mxu0 0.0
    %2315 = vmatprep.subr.mxu0 0.0
    %2316 = vmatpush1.msra.mxu0 0.0
    %2317 = vmatprep.subr.mxu0 0.0
    %2318 = vmatpush1.msra.mxu0 0.0
    %2319 = vmatprep.subr.mxu0 0.0
    %2320 = vmatpush1.msra.mxu0 0.0
    %2321 = vmatprep.subr.mxu0 0.0
    %2322 = vmatpush1.msra.mxu0 0.0
    %2323 = vmatprep.subr.mxu0 0.0
    %2324 = vmatpush1.msra.mxu0 0.0
    %2325 = vmatprep.subr.mxu0 0.0
    %2326 = vmatpush1.msra.mxu0 0.0
    %2327 = vmatprep.subr.mxu0 0.0
    %2328 = vmatpush1.msra.mxu0 0.0
    %2329 = vmatprep.subr.mxu0 0.0
    %2330 = vmatpush1.msra.mxu0 0.0
    %2331 = vmatprep.mubr.f32.mxu0 0.0
    %2332 = vmatmul.mubr.f32.gmra.mrb[0].mxu0 %v1410
    %v2333 = vpop.f32.mrb[0].mxu0
    %v2334 = vpop.f32.mrb[0].mxu0
    %2335 = vmatprep.mubr.f32.mxu0 0.0
    %2336 = vmatmul.mubr.f32.gmra.mrb[0].mxu0 %v1415
    %v2337 = vpop.f32.mrb[0].mxu0
    %v2338 = vpop.f32.mrb[0].mxu0
    %2339 = vmatprep.mubr.f32.mxu0 0.0
    %2340 = vmatmul.mubr.f32.gmra.mrb[0].mxu0 %v1420
    %v2341 = vpop.f32.mrb[0].mxu0
    %v2342 = vpop.f32.mrb[0].mxu0
    %2343 = vmatprep.mubr.f32.mxu0 0.0
    %2344 = vmatmul.mubr.f32.gmra.mrb[0].mxu0 %v1425
    %v2345 = vpop.f32.mrb[0].mxu0
    %v2346 = vpop.f32.mrb[0].mxu0
    %2347 = vmatprep.mubr.f32.mxu0 0.0
    %2348 = vmatmul.mubr.f32.gmra.mrb[0].mxu0 %v1430
    %v2349 = vpop.f32.mrb[0].mxu0
    %v2350 = vadd.f32 0.0, %v2349
    %v2351 = vpop.f32.mrb[0].mxu0
    %v2352 = vadd.f32 0.0, %v2351
    %2353 = vmatprep.mubr.f32.mxu0 0.0
    %2354 = vmatmul.mubr.f32.gmra.mrb[0].mxu0 %v1435
    %v2355 = vpop.f32.mrb[0].mxu0
    %v2356 = vadd.f32 0.0, %v2355
    %v2357 = vpop.f32.mrb[0].mxu0
    %v2358 = vadd.f32 0.0, %v2357
    %2359 = vmatprep.mubr.f32.mxu0 0.0
    %2360 = vmatmul.mubr.f32.gmra.mrb[0].mxu0 %v1440
    %v2361 = vpop.f32.mrb[0].mxu0
    %v2362 = vadd.f32 0.0, %v2361
    %v2363 = vpop.f32.mrb[0].mxu0
    %v2364 = vadd.f32 0.0, %v2363
    %2365 = vmatprep.mubr.f32.mxu0 0.0
    %2366 = vmatmul.mubr.f32.gmra.mrb[0].mxu0 %v1445
    %v2367 = vpop.f32.mrb[0].mxu0
    %v2368 = vadd.f32 0.0, %v2367
    %v2369 = vpop.f32.mrb[0].mxu0
    %v2370 = vadd.f32 0.0, %v2369
    %2371 = vdwg.mxu0
    %2372 = vmatprep.subr.mxu0 0.0
    %2373 = vmatpush1.msra.mxu0 %v1816
    %2374 = vmatprep.subr.mxu0 0.0
    %2375 = vmatpush1.msra.mxu0 %v1825
    %2376 = vmatprep.subr.mxu0 0.0
    %2377 = vmatpush1.msra.mxu0 %v1834
    %2378 = vmatprep.subr.mxu0 0.0
    %2379 = vmatpush1.msra.mxu0 %v1843
    %2380 = vmatprep.subr.mxu0 0.0
    %2381 = vmatpush1.msra.mxu0 %v1852
    %2382 = vmatprep.subr.mxu0 0.0
    %2383 = vmatpush1.msra.mxu0 %v1861
    %2384 = vmatprep.subr.mxu0 0.0
    %2385 = vmatpush1.msra.mxu0 %v1870
    %2386 = vmatprep.subr.mxu0 0.0
    %2387 = vmatpush1.msra.mxu0 %v1879
    %2388 = vmatprep.subr.mxu0 0.0
    %2389 = vmatpush1.msra.mxu0 %v1888
    %2390 = vmatprep.subr.mxu0 0.0
    %2391 = vmatpush1.msra.mxu0 %v1897
    %2392 = vmatprep.subr.mxu0 0.0
    %2393 = vmatpush1.msra.mxu0 %v1906
    %2394 = vmatprep.subr.mxu0 0.0
    %2395 = vmatpush1.msra.mxu0 %v1915
    %2396 = vmatprep.subr.mxu0 0.0
    %2397 = vmatpush1.msra.mxu0 %v1924
    %2398 = vmatprep.subr.mxu0 0.0
    %2399 = vmatpush1.msra.mxu0 %v1933
    %2400 = vmatprep.subr.mxu0 0.0
    %2401 = vmatpush1.msra.mxu0 %v1942
    %2402 = vmatprep.subr.mxu0 0.0
    %2403 = vmatpush1.msra.mxu0 %v1951
    %2404 = vmatprep.subr.mxu0 0.0
    %2405 = vmatpush1.msra.mxu0 0.0
    %2406 = vmatprep.subr.mxu0 0.0
    %2407 = vmatpush1.msra.mxu0 0.0
    %2408 = vmatprep.subr.mxu0 0.0
    %2409 = vmatpush1.msra.mxu0 0.0
    %2410 = vmatprep.subr.mxu0 0.0
    %2411 = vmatpush1.msra.mxu0 0.0
    %2412 = vmatprep.subr.mxu0 0.0
    %2413 = vmatpush1.msra.mxu0 0.0
    %2414 = vmatprep.subr.mxu0 0.0
    %2415 = vmatpush1.msra.mxu0 0.0
    %2416 = vmatprep.subr.mxu0 0.0
    %2417 = vmatpush1.msra.mxu0 0.0
    %2418 = vmatprep.subr.mxu0 0.0
    %2419 = vmatpush1.msra.mxu0 0.0
    %2420 = vmatprep.subr.mxu0 0.0
    %2421 = vmatpush1.msra.mxu0 0.0
    %2422 = vmatprep.subr.mxu0 0.0
    %2423 = vmatpush1.msra.mxu0 0.0
    %2424 = vmatprep.subr.mxu0 0.0
    %2425 = vmatpush1.msra.mxu0 0.0
    %2426 = vmatprep.subr.mxu0 0.0
    %2427 = vmatpush1.msra.mxu0 0.0
    %2428 = vmatprep.subr.mxu0 0.0
    %2429 = vmatpush1.msra.mxu0 0.0
    %2430 = vmatprep.subr.mxu0 0.0
    %2431 = vmatpush1.msra.mxu0 0.0
    %2432 = vmatprep.subr.mxu0 0.0
    %2433 = vmatpush1.msra.mxu0 0.0
    %2434 = vmatprep.subr.mxu0 0.0
    %2435 = vmatpush1.msra.mxu0 0.0
    %2436 = vmatprep.mubr.f32.mxu0 0.0
    %2437 = vmatmul.mubr.f32.gmra.mrb[0].mxu0 %v1410
    %v2438 = vpop.f32.mrb[0].mxu0
    %v2439 = vadd.f32 0.0, %v2438
    %v2440 = vpop.f32.mrb[0].mxu0
    %2441 = vmatprep.mubr.f32.mxu0 0.0
    %2442 = vmatmul.mubr.f32.gmra.mrb[0].mxu0 %v1415
    %v2443 = vpop.f32.mrb[0].mxu0
    %v2444 = vadd.f32 0.0, %v2443
    %v2445 = vpop.f32.mrb[0].mxu0
    %2446 = vmatprep.mubr.f32.mxu0 0.0
    %2447 = vmatmul.mubr.f32.gmra.mrb[0].mxu0 %v1420
    %v2448 = vpop.f32.mrb[0].mxu0
    %v2449 = vadd.f32 0.0, %v2448
    %v2450 = vpop.f32.mrb[0].mxu0
    %2451 = vmatprep.mubr.f32.mxu0 0.0
    %2452 = vmatmul.mubr.f32.gmra.mrb[0].mxu0 %v1425
    %v2453 = vpop.f32.mrb[0].mxu0
    %v2454 = vadd.f32 0.0, %v2453
    %v2455 = vpop.f32.mrb[0].mxu0
    %2456 = vmatprep.mubr.f32.mxu0 0.0
    %2457 = vmatmul.mubr.f32.gmra.mrb[0].mxu0 %v1430
    %v2458 = vpop.f32.mrb[0].mxu0
    %v2459 = vpop.f32.mrb[0].mxu0
    %2460 = vmatprep.mubr.f32.mxu0 0.0
    %2461 = vmatmul.mubr.f32.gmra.mrb[0].mxu0 %v1435
    %v2462 = vpop.f32.mrb[0].mxu0
    %v2463 = vpop.f32.mrb[0].mxu0
    %2464 = vmatprep.mubr.f32.mxu0 0.0
    %2465 = vmatmul.mubr.f32.gmra.mrb[0].mxu0 %v1440
    %v2466 = vpop.f32.mrb[0].mxu0
    %v2467 = vpop.f32.mrb[0].mxu0
    %2468 = vmatprep.mubr.f32.mxu0 0.0
    %2469 = vmatmul.mubr.f32.gmra.mrb[0].mxu0 %v1445
    %v2470 = vpop.f32.mrb[0].mxu0
    %v2471 = vpop.f32.mrb[0].mxu0
    %2472 = vdwg.mxu0
    %v2473 = vsub.f32 %v1213, %v2439
    %v2474 = vsub.f32 %v1218, %v2444
    %v2475 = vsub.f32 %v1223, %v2449
    %v2476 = vsub.f32 %v1228, %v2454
    %v2477 = vadd.f32 %v2035, %v2473
    %v2478 = vadd.f32 %v2041, %v2474
    %v2479 = vadd.f32 %v2047, %v2475
    %v2480 = vadd.f32 %v2053, %v2476
    %v2481 = vmax.f32 %v2477, 0.0
    %v2482 = vmax.f32 %v2478, 0.0
    %v2483 = vmax.f32 %v2479, 0.0
    %v2484 = vmax.f32 %v2480, 0.0
    %v2485 = vadd.f32 %v2481, 0.0
    %v2486 = vadd.f32 %v2482, 0.0
    %v2487 = vadd.f32 %v2483, 0.0
    %v2488 = vadd.f32 %v2484, 0.0
    %v2489 = vadd.f32 %v2037, %v2473
    %v2490 = vadd.f32 %v2043, %v2474
    %v2491 = vadd.f32 %v2049, %v2475
    %v2492 = vadd.f32 %v2055, %v2476
    %v2493 = vmax.f32 %v2489, 0.0
    %v2494 = vmax.f32 %v2490, 0.0
    %v2495 = vmax.f32 %v2491, 0.0
    %v2496 = vmax.f32 %v2492, 0.0
    %v2497 = vadd.f32 %v2485, %v2493
    %v2498 = vadd.f32 %v2486, %v2494
    %v2499 = vadd.f32 %v2487, %v2495
    %v2500 = vadd.f32 %v2488, %v2496
    %v2501 = vadd.f32 %v2140, %v2473
    %v2502 = vadd.f32 %v2146, %v2474
    %v2503 = vadd.f32 %v2152, %v2475
    %v2504 = vadd.f32 %v2158, %v2476
    %v2505 = vmax.f32 %v2501, 0.0
    %v2506 = vmax.f32 %v2502, 0.0
    %v2507 = vmax.f32 %v2503, 0.0
    %v2508 = vmax.f32 %v2504, 0.0
    %v2509 = vadd.f32 %v2497, %v2505
    %v2510 = vadd.f32 %v2498, %v2506
    %v2511 = vadd.f32 %v2499, %v2507
    %v2512 = vadd.f32 %v2500, %v2508
    %v2513 = vadd.f32 %v2142, %v2473
    %v2514 = vadd.f32 %v2148, %v2474
    %v2515 = vadd.f32 %v2154, %v2475
    %v2516 = vadd.f32 %v2160, %v2476
    %v2517 = vmax.f32 %v2513, 0.0
    %v2518 = vmax.f32 %v2514, 0.0
    %v2519 = vmax.f32 %v2515, 0.0
    %v2520 = vmax.f32 %v2516, 0.0
    %v2521 = vadd.f32 %v2509, %v2517
    %v2522 = vadd.f32 %v2510, %v2518
    %v2523 = vadd.f32 %v2511, %v2519
    %v2524 = vadd.f32 %v2512, %v2520
    %v2525 = vadd.f32 %v2245, %v2473
    %v2526 = vadd.f32 %v2251, %v2474
    %v2527 = vadd.f32 %v2257, %v2475
    %v2528 = vadd.f32 %v2263, %v2476
    %v2529 = vmax.f32 %v2525, 0.0
    %v2530 = vmax.f32 %v2526, 0.0
    %v2531 = vmax.f32 %v2527, 0.0
    %v2532 = vmax.f32 %v2528, 0.0
    %v2533 = vadd.f32 %v2521, %v2529
    %v2534 = vadd.f32 %v2522, %v2530
    %v2535 = vadd.f32 %v2523, %v2531
    %v2536 = vadd.f32 %v2524, %v2532
    %v2537 = vadd.f32 %v2247, %v2473
    %v2538 = vadd.f32 %v2253, %v2474
    %v2539 = vadd.f32 %v2259, %v2475
    %v2540 = vadd.f32 %v2265, %v2476
    %v2541 = vmax.f32 %v2537, 0.0
    %v2542 = vmax.f32 %v2538, 0.0
    %v2543 = vmax.f32 %v2539, 0.0
    %v2544 = vmax.f32 %v2540, 0.0
    %v2545 = vadd.f32 %v2533, %v2541
    %v2546 = vadd.f32 %v2534, %v2542
    %v2547 = vadd.f32 %v2535, %v2543
    %v2548 = vadd.f32 %v2536, %v2544
    %v2549 = vadd.f32 %v2350, %v2473
    %v2550 = vadd.f32 %v2356, %v2474
    %v2551 = vadd.f32 %v2362, %v2475
    %v2552 = vadd.f32 %v2368, %v2476
    %v2553 = vmax.f32 %v2549, 0.0
    %v2554 = vmax.f32 %v2550, 0.0
    %v2555 = vmax.f32 %v2551, 0.0
    %v2556 = vmax.f32 %v2552, 0.0
    %v2557 = vadd.f32 %v2545, %v2553
    %v2558 = vadd.f32 %v2546, %v2554
    %v2559 = vadd.f32 %v2547, %v2555
    %v2560 = vadd.f32 %v2548, %v2556
    %v2561 = vadd.f32 %v2352, %v2473
    %v2562 = vadd.f32 %v2358, %v2474
    %v2563 = vadd.f32 %v2364, %v2475
    %v2564 = vadd.f32 %v2370, %v2476
    %v2565 = vmax.f32 %v2561, 0.0
    %v2566 = vmax.f32 %v2562, 0.0
    %v2567 = vmax.f32 %v2563, 0.0
    %v2568 = vmax.f32 %v2564, 0.0
    %v2569 = vadd.f32 %v2557, %v2565
    %v2570 = vadd.f32 %v2558, %v2566
    %v2571 = vadd.f32 %v2559, %v2567
    %v2572 = vadd.f32 %v2560, %v2568
    %v2573 = vmul.f32 %v2569, 0.125
    %v2574 = vmul.f32 %v2570, 0.125
    %v2575 = vmul.f32 %v2571, 0.125
    %v2576 = vmul.f32 %v2572, 0.125
    %s2577 = scalar_lea.vmem [#allocation2], 32
    %2578 = vst [vmem:[%s2577] sm:$0xff] %v2573
    %2579 = vst [vmem:[%s2577 + $0x8] sm:$0xff] %v2574
    %2580 = vst [vmem:[%s2577 + $0x10] sm:$0xff] %v2575
    %2581 = vst [vmem:[%s2577 + $0x18] sm:$0xff] %v2576
    // Predicated region
    $region18: #{tpu_custom_call.1} parent=1 // pred_check
      _
    $region19: #{tpu_custom_call.1} parent=1 // pred_check_branch
      %2583 = sbr.rel (0) target = $region21
    $region20: #{tpu_custom_call.1} parent=1 // pred_region
      %s2585 = ssub.s32 1024, 1024
      %2586 = vsyncadd [#allocation3], %s2585
      %s2587 = sshll.u32 [#allocation2], 4
      %s2588 = int_to_ptr.vmem [resolvable:$true] %s2587
      %2593 = dma.vmem_to_hbm [thread:$0]  %s2588, 1024, %s4, [#allocation3], 128, 128, 8
    $region21: #{tpu_custom_call.1} parent=1 // pred_fallthru
      _
    // Predicated region
    $region22: #{tpu_custom_call.1} parent=1 // pred_check
      _
    $region23: #{tpu_custom_call.1} parent=1 // pred_check_branch
      %2595 = sbr.rel (0) target = $region25
    $region24: #{tpu_custom_call.1} parent=1 // pred_region
      %2596 = dma.done [#allocation3], 1024
    $region25: #{tpu_custom_call.1} parent=1 // pred_fallthru
      _
    %2597 = vsyncpa [#allocation3], 1

</llo_original>
